<compile_context>
chip_gen: v7x
topology: tpu7x:2x2x1
jax: 0.10.0
libtpu: 0.0.40
codegen_flags: <defaults>
</compile_context>

<pallas_src>
import functools

import jax
import jax.numpy as jnp
import numpy as np
from jax.experimental import pallas as pl
from jax.experimental.pallas import tpu as pltpu  # noqa: F401  (TPU backend)


# ----------------------------------------------------------------------------
# The single fused Pallas kernel.
# ----------------------------------------------------------------------------
def _fused_forward_kernel(patches1_ref, npf_ref,
                          wc1_ref, bc1_ref,
                          wc2cat_ref, bc2_ref, s2_ref,
                          wnp_ref, bnp_ref,
                          w1np_ref, w1cf_ref, b1_ref,
                          w2_ref, b2_ref,
                          q_ref):
    cdt = wc1_ref.dtype  # dtype fed into the MXU (f32, or bf16 on v6e/v7x)

    def mm(a, b):        # matmul with f32 accumulation regardless of cdt
        return jnp.dot(a.astype(cdt), b.astype(cdt),
                       preferred_element_type=jnp.float32)

    def psum(parts):     # sum a list of partial accumulators (skip unused)
        parts = [p for p in parts if p is not None]
        out = parts[0]
        for p in parts[1:]:
            out = out + p
        return out

    B = npf_ref.shape[0]
    c2 = bc2_ref.shape[1]
    n_k2 = s2_ref.shape[0]
    n_sp2 = w1cf_ref.shape[0]

    # conv1: im2col'd patches (from the wrapper, row-padded) @ weights + ReLU.
    y1 = jnp.maximum(mm(patches1_ref[...], wc1_ref[...]) + bc1_ref[...], 0.0)

    # conv2 with on-chip im2col: ONE lane-dense matmul against all kernel
    # offsets at once, then n_k2 selection matmuls on 16-wide column slices,
    # accumulated on 3 independent chains.  Rows ordered (spatial pos, batch).
    yw = mm(y1, wc2cat_ref[...])                              # [r1p, n_k2*c2]
    acc = [None, None, None]
    for k in range(n_k2):
        t = mm(s2_ref[k], yw[:, k * c2:(k + 1) * c2])         # [r2p, c2]
        j = k % 3
        acc[j] = t if acc[j] is None else acc[j] + t
    y2 = jnp.maximum(psum(acc) + bc2_ref[...], 0.0)

    # Non-pixel fc + ReLU.
    nph = jnp.maximum(mm(npf_ref[...], wnp_ref[...]) + bnp_ref[...], 0.0)

    # Fused first layer of all advantage branches + value branch.  The PyTorch
    # NCHW-flatten permutation is baked into w1cf; static 2-row slices of y2
    # replace the old esel selection matmuls.  3 accumulation chains.
    hacc = [mm(nph, w1np_ref[...]) + b1_ref[...], None, None]
    for s in range(n_sp2):
        t = mm(y2[s * B:(s + 1) * B, :], w1cf_ref[s])         # [B, hidden]
        j = s % 3
        hacc[j] = t if hacc[j] is None else hacc[j] + t
    h = jnp.maximum(psum(hacc), 0.0)

    # Fused second layer: Q = V + (A - localMean(A)).  reduceLocalMean and the
    # value broadcast are folded into w2/b2, which are zero-padded to 128 lanes
    # so this store is lane-dense.
    q_ref[...] = (mm(h, w2_ref[...]) + b2_ref[...]).astype(q_ref.dtype)


def _full_block_spec(shape):
    nd = len(shape)
    return pl.BlockSpec(shape, lambda *_: (0,) * nd)


# ----------------------------------------------------------------------------
# Wrapper: conv1 im2col (XLA preprocessing, same jit) + one pallas_call.
# ----------------------------------------------------------------------------
def im2col(x_nhwc, k, stride):
    B, H, W, C = x_nhwc.shape
    OH = (H - k) // stride + 1
    OW = (W - k) // stride + 1
    cols = []
    for i in range(k):
        for j in range(k):
            cols.append(x_nhwc[:, i:i + stride * (OH - 1) + 1:stride,
                               j:j + stride * (OW - 1) + 1:stride, :])
    patches = jnp.stack(cols, axis=3)                 # [B, OH, OW, k*k, C]
    return patches.reshape(B * OH * OW, k * k * C)


def branch_dddqn_forward(params, x_nchw, non_pixel_feature):
    # The selection matrices bake in the batch size and conv spatial sizes:
    # reject mismatched inputs instead of silently computing garbage.
    assert tuple(x_nchw.shape) == params["x_shape"], (x_nchw.shape, params["x_shape"])
    assert tuple(non_pixel_feature.shape) == params["np_shape"], non_pixel_feature.shape

    B = x_nchw.shape[0]
    k1, st1 = params["conv1_ks"]
    cdt = params["wc1"].dtype

    # conv1 patch extraction on the raw observation stays as one XLA fusion
    # inside the same jit; everything downstream is one fused Pallas kernel.
    x_nhwc = jnp.transpose(x_nchw, (0, 2, 3, 1))
    patches1 = im2col(x_nhwc, k1, st1)
    r1p = params["s2"].shape[2]                               # padded row count
    patches1 = jnp.pad(patches1, ((0, r1p - patches1.shape[0]), (0, 0)))
    patches1 = patches1.astype(cdt)
    npf = non_pixel_feature.astype(cdt)

    args = (patches1, npf,
            params["wc1"], params["bc1"],
            params["wc2cat"], params["bc2"], params["s2"],
            params["wnp"], params["bnp"],
            params["w1np"], params["w1cf"], params["b1"],
            params["w2"], params["b2"])
    total_p = params["w2"].shape[1]
    q_pad = pl.pallas_call(
        _fused_forward_kernel,
        out_shape=jax.ShapeDtypeStruct((B, total_p), jnp.float32),
        in_specs=[_full_block_spec(a.shape) for a in args],
        out_specs=_full_block_spec((B, total_p)),
    )(*args)
    # Lane-dense kernel output; slice back to the real action width in XLA.
    return q_pad[:, :params["total"]]


# ----------------------------------------------------------------------------
# Deterministic parameter construction (PyTorch-style raw params) plus all
# fused-kernel parameter preprocessing, hoisted out of the forward pass.
# ----------------------------------------------------------------------------
def _dense(key, fan_in, fan_out):
    kw, kb = jax.random.split(key)
    bound = 1.0 / np.sqrt(fan_in)
    w = jax.random.uniform(kw, (fan_in, fan_out), jnp.float32, -bound, bound)
    b = jax.random.uniform(kb, (fan_out,), jnp.float32, -bound, bound)
    return w, b


def _conv(key, out_c, in_c, k):
    kw, kb = jax.random.split(key)
    fan_in = in_c * k * k
    bound = 1.0 / np.sqrt(fan_in)
    w = jax.random.uniform(kw, (out_c, in_c, k, k), jnp.float32, -bound, bound)
    b = jax.random.uniform(kb, (out_c,), jnp.float32, -bound, bound)
    return w, b


def _round_up(x, m):
    return ((x + m - 1) // m) * m


def init_params(key, convs_cfg, in_channels, input_hw, non_pixel_shape,
                non_pixel_layer, hidden_actions, hidden_value, action_spaces,
                batch_size):
    # The fused kernel is specialised to: two conv layers, one hidden layer per
    # branch / value / non-pixel stack, aggregator == 'reduceLocalMean'.
    assert len(convs_cfg) == 2
    assert len(hidden_actions) == 1 and len(hidden_value) == 1 and len(non_pixel_layer) == 1

    H, W = input_hw
    (c1, k1, st1), (c2, k2, st2) = convs_cfg
    oh1, ow1 = (H - k1) // st1 + 1, (W - k1) // st1 + 1
    oh2, ow2 = (oh1 - k2) // st2 + 1, (ow1 - k2) // st2 + 1
    n_sp1, n_sp2 = oh1 * ow1, oh2 * ow2
    in_feature = n_sp2 * c2
    np_l = non_pixel_layer[0]
    feat_dim = in_feature + np_l
    ha, hv = hidden_actions[0], hidden_value[0]
    nb = len(action_spaces)
    total = int(sum(action_spaces))
    B = batch_size

    r1p = _round_up(B * n_sp1, 8)      # conv1-output rows, sublane padded (98->104)
    r2p = _round_up(B * n_sp2, 8)      # conv2-output rows, sublane padded (18->24)
    total_p = _round_up(total, 128)    # lane-dense head output width (12->128)

    keys = iter(jax.random.split(key, 3 + 2 * nb + 2))
    w_c1, b_c1 = _conv(next(keys), c1, in_channels, k1)
    w_c2, b_c2 = _conv(next(keys), c2, c1, k2)
    w_np, b_np = _dense(next(keys), non_pixel_shape, np_l)
    branches = []
    for a in action_spaces:
        w1, b1 = _dense(next(keys), feat_dim, ha)
        w2, b2 = _dense(next(keys), ha, a)
        branches.append((w1, b1, w2, b2))
    wv1, bv1 = _dense(next(keys), feat_dim, hv)
    wv2, bv2 = _dense(next(keys), hv, 1)

    # ---- conv1 as an im2col matmul: [O,I,kh,kw] -> [kh*kw*I, O] -------------
    wc1 = np.transpose(np.asarray(w_c1), (2, 3, 1, 0)).reshape(k1 * k1 * in_channels, c1)
    bc1 = np.asarray(b_c1).reshape(1, c1)

    # ---- conv2 weights for ALL kernel offsets concatenated along lanes ------
    # wc2cat[:, k*c2 + c] = w_c2[c, :, ki, kj], with k = ki*k2 + kj.
    wc2_perk = np.transpose(np.asarray(w_c2), (2, 3, 1, 0)).reshape(k2 * k2, c1, c2)
    wc2cat = np.transpose(wc2_perk, (1, 0, 2)).reshape(c1, k2 * k2 * c2)
    bc2 = np.asarray(b_c2).reshape(1, c2)

    # ---- 0/1 selection matrices implementing conv2's im2col on-chip ---------
    # s2[k, s*B + b, r] = 1, r = conv1-output row (b, st2*o2h+ki, st2*o2w+kj).
    # Row / column dims padded to sublane multiples (extra rows/cols are zero,
    # so the padded conv1 rows never contribute and the padded conv2 rows are
    # never read by the head slices).
    s2 = np.zeros((k2 * k2, r2p, r1p), np.float32)
    for ki in range(k2):
        for kj in range(k2):
            kk = ki * k2 + kj
            for o2h in range(oh2):
                for o2w in range(ow2):
                    s = o2h * ow2 + o2w
                    for b in range(B):
                        r = b * n_sp1 + (st2 * o2h + ki) * ow1 + (st2 * o2w + kj)
                        s2[kk, s * B + b, r] = 1.0

    # ---- fused first layer: all adv branches + value branch -----------------
    w1_comb = np.concatenate([np.asarray(br[0]) for br in branches] + [np.asarray(wv1)], axis=1)
    b1_comb = np.concatenate([np.asarray(br[1]) for br in branches] + [np.asarray(bv1)], axis=0)
    hidden = w1_comb.shape[1]
    w1np = w1_comb[:np_l, :]                                  # non-pixel rows
    # conv-flat rows reordered so row order is (spatial pos, channel): this
    # bakes the PyTorch NCHW x.view(B,-1) permutation into the weights.
    w1cf = w1_comb[np_l:, :].reshape(c2, n_sp2, hidden).transpose(1, 0, 2)

    # ---- fused second layer: reduceLocalMean + value broadcast folded, ------
    # ---- zero-padded to a lane-dense width -----------------------------------
    w2_bd = np.zeros((nb * ha, total), np.float64)
    b2_all = np.zeros((total,), np.float64)
    m = np.zeros((total, total), np.float64)
    off = 0
    for i, a in enumerate(action_spaces):
        w2_bd[i * ha:(i + 1) * ha, off:off + a] = np.asarray(branches[i][2]).astype(np.float64)
        b2_all[off:off + a] = np.asarray(branches[i][3]).astype(np.float64)
        m[off:off + a, off:off + a] = 1.0 / a
        off += a
    proj = np.eye(total) - m
    w2_adv = w2_bd @ proj
    w2_val = np.asarray(wv2).astype(np.float64) @ np.ones((1, total))
    w2_comb = np.concatenate([w2_adv, w2_val], axis=0)        # [hidden, total]
    b2_comb = b2_all @ proj + float(np.asarray(bv2)[0])
    w2_pad = np.zeros((hidden, total_p), np.float64)
    w2_pad[:, :total] = w2_comb
    b2_pad = np.zeros((1, total_p), np.float64)
    b2_pad[0, :total] = b2_comb
    # TODO(synk): only the default 'reduceLocalMean' aggregator is folded into
    # the fused head; reduceLocalMax / reduceGlobalMean / reduceGlobalMax are
    # not implemented.

    params = dict(
        x_shape=(B, in_channels, H, W),
        np_shape=(B, non_pixel_shape),
        conv1_ks=(k1, st1),
        total=total,
        wc1=jnp.asarray(wc1, jnp.float32), bc1=jnp.asarray(bc1, jnp.float32),
        wc2cat=jnp.asarray(wc2cat, jnp.float32), bc2=jnp.asarray(bc2, jnp.float32),
        s2=jnp.asarray(s2, jnp.float32),
        wnp=jnp.asarray(np.asarray(w_np), jnp.float32),
        bnp=jnp.asarray(np.asarray(b_np).reshape(1, np_l), jnp.float32),
        w1np=jnp.asarray(w1np, jnp.float32),
        w1cf=jnp.asarray(w1cf, jnp.float32),
        b1=jnp.asarray(b1_comb.reshape(1, hidden), jnp.float32),
        w2=jnp.asarray(w2_pad, jnp.float32), b2=jnp.asarray(b2_pad, jnp.float32),
    )
    ref = dict(convs=[(w_c1, b_c1, k1, st1), (w_c2, b_c2, k2, st2)],
               non_pixel=[(w_np, b_np)], branches=branches,
               wv1=wv1, bv1=bv1, wv2=wv2, bv2=bv2,
               action_spaces=action_spaces)
    return params, ref


# Weights that feed the MXU (the biases stay f32; all elementwise work in the
# kernel is f32 regardless).  s2 is exact 0/1, so its bf16 cast is lossless.
_MXU_WEIGHT_KEYS = ("wc1", "wc2cat", "s2", "wnp", "w1np", "w1cf", "w2")


def cast_params(params, dtype):
    """bf16 weight cast for v6e/v7x (halves weight DMA, uses the bf16 MXU)."""
    out = dict(params)
    for k in _MXU_WEIGHT_KEYS:
        out[k] = params[k].astype(dtype)
    return out


# ----------------------------------------------------------------------------
# Pure-JAX reference mirroring the PyTorch forward (validation only).
# ----------------------------------------------------------------------------
def reference_forward(ref, x_nchw, non_pixel_feature):
    np_feat = non_pixel_feature
    for (w, b) in ref["non_pixel"]:
        np_feat = jax.nn.relu(np_feat @ w + b)
    x = x_nchw
    for (w, b, k, s) in ref["convs"]:
        x = jax.lax.conv_general_dilated(
            x, w, (s, s), "VALID", dimension_numbers=("NCHW", "OIHW", "NCHW"))
        x = jax.nn.relu(x + b[None, :, None, None])
    flat = x.reshape(x.shape[0], -1)
    feat = jnp.concatenate([np_feat, flat], axis=1)
    advs = []
    for (w1, b1, w2, b2) in ref["branches"]:
        a = jax.nn.relu(feat @ w1 + b1)
        a = a @ w2 + b2
        a = a - a.mean(axis=1, keepdims=True)          # reduceLocalMean
        advs.append(a)
    adv_out = jnp.concatenate(advs, axis=1)
    v = jax.nn.relu(feat @ ref["wv1"] + ref["bv1"])
    v = v @ ref["wv2"] + ref["bv2"]                    # [B,1], broadcast
    return v + adv_out


# ----------------------------------------------------------------------------
if __name__ == "__main__":
    key = jax.random.PRNGKey(0)

    # Small configuration consistent with the module's constructor.  (The
    # kernel scales with batch_size via init_params; larger, 8-aligned batches
    # amortize the fixed launch + weight-DMA cost much better.)
    B, in_channels, H, W = 2, 4, 16, 16
    convs_cfg = [(8, 4, 2), (16, 3, 2)]        # (out_channels, kernel, stride)
    non_pixel_shape = 6
    non_pixel_layer = [16]
    hidden_actions = [32]
    hidden_value = [32]
    action_spaces = [3, 4, 5]                  # num_branches = 3, total = 12

    kp, kx, kn = jax.random.split(key, 3)
    params, ref = init_params(kp, convs_cfg, in_channels, (H, W),
                              non_pixel_shape, non_pixel_layer,
                              hidden_actions, hidden_value, action_spaces,
                              batch_size=B)

    x = jax.random.normal(kx, (B, in_channels, H, W), jnp.float32)        # NCHW
    non_pixel = jax.random.normal(kn, (B, non_pixel_shape), jnp.float32)

    # f32 path: strict check against the pure-JAX reference.
    fwd = jax.jit(functools.partial(branch_dddqn_forward, params))
    q = jax.block_until_ready(fwd(x, non_pixel))
    q_ref = jax.block_until_ready(reference_forward(ref, x, non_pixel))
    assert q.shape == (B, sum(action_spaces)), q.shape
    np.testing.assert_allclose(np.asarray(q), np.asarray(q_ref), rtol=1e-4, atol=1e-4)

    # bf16 weight path (the v6e/v7x-targeted cast): same kernel, looser check.
    params_bf16 = cast_params(params, jnp.bfloat16)
    fwd_bf16 = jax.jit(functools.partial(branch_dddqn_forward, params_bf16))
    q_bf16 = jax.block_until_ready(fwd_bf16(x, non_pixel))
    assert q_bf16.shape == (B, sum(action_spaces)), q_bf16.shape
    np.testing.assert_allclose(np.asarray(q_bf16, dtype=np.float32),
                               np.asarray(q_ref), rtol=1e-1, atol=1e-1)

    print("KERNEL_OK")
</pallas_src>

<mosaic_0001>
module attributes {stable_mosaic.version = 11 : i64} {
  func.func @_fused_forward_kernel(%arg0: memref<104x64xf32, #tpu.memory_space<vmem>>, %arg1: memref<2x6xf32, #tpu.memory_space<vmem>>, %arg2: memref<64x8xf32, #tpu.memory_space<vmem>>, %arg3: memref<1x8xf32, #tpu.memory_space<vmem>>, %arg4: memref<8x144xf32, #tpu.memory_space<vmem>>, %arg5: memref<1x16xf32, #tpu.memory_space<vmem>>, %arg6: memref<9x24x104xf32, #tpu.memory_space<vmem>>, %arg7: memref<6x16xf32, #tpu.memory_space<vmem>>, %arg8: memref<1x16xf32, #tpu.memory_space<vmem>>, %arg9: memref<16x128xf32, #tpu.memory_space<vmem>>, %arg10: memref<9x16x128xf32, #tpu.memory_space<vmem>>, %arg11: memref<1x128xf32, #tpu.memory_space<vmem>>, %arg12: memref<128x128xf32, #tpu.memory_space<vmem>>, %arg13: memref<1x128xf32, #tpu.memory_space<vmem>>, %arg14: memref<2x128xf32, #tpu.memory_space<vmem>>) attributes {dimension_semantics = [], scalar_prefetch = 0 : i64, scratch_operands = 0 : i64, tpu.core_type = #tpu.core_type<tc>} {
    %c0 = arith.constant 0 : index
    %c0_0 = arith.constant 0 : index
    %0 = vector.load %arg0[%c0, %c0_0] : memref<104x64xf32, #tpu.memory_space<vmem>>, vector<104x64xf32>
    %c0_1 = arith.constant 0 : index
    %c0_2 = arith.constant 0 : index
    %1 = vector.load %arg2[%c0_1, %c0_2] : memref<64x8xf32, #tpu.memory_space<vmem>>, vector<64x8xf32>
    %cst = arith.constant dense<0.000000e+00> : vector<104x8xf32>
    %2 = tpu.matmul %0, %1, %cst {dimension_numbers = #tpu.dot_dimension_numbers<[1], [0], [0], [1], [0, 0, 1, 1], [], []>} : vector<104x64xf32>, vector<64x8xf32>, vector<104x8xf32> -> vector<104x8xf32>
    %c0_3 = arith.constant 0 : index
    %c0_4 = arith.constant 0 : index
    %3 = vector.load %arg3[%c0_3, %c0_4] : memref<1x8xf32, #tpu.memory_space<vmem>>, vector<1x8xf32>
    %4 = vector.broadcast %3 : vector<1x8xf32> to vector<104x8xf32>
    %5 = arith.addf %2, %4 : vector<104x8xf32>
    %cst_5 = arith.constant 0.000000e+00 : f32
    %6 = vector.broadcast %cst_5 : f32 to vector<104x8xf32>
    %7 = arith.maximumf %5, %6 : vector<104x8xf32>
    %c0_6 = arith.constant 0 : index
    %c0_7 = arith.constant 0 : index
    %8 = vector.load %arg4[%c0_6, %c0_7] : memref<8x144xf32, #tpu.memory_space<vmem>>, vector<8x144xf32>
    %cst_8 = arith.constant dense<0.000000e+00> : vector<104x144xf32>
    %9 = tpu.matmul %7, %8, %cst_8 {dimension_numbers = #tpu.dot_dimension_numbers<[1], [0], [0], [1], [0, 0, 1, 1], [], []>} : vector<104x8xf32>, vector<8x144xf32>, vector<104x144xf32> -> vector<104x144xf32>
    %c0_9 = arith.constant 0 : index
    %c0_10 = arith.constant 0 : index
    %c0_11 = arith.constant 0 : index
    %10 = vector.load %arg6[%c0_9, %c0_10, %c0_11] : memref<9x24x104xf32, #tpu.memory_space<vmem>>, vector<1x24x104xf32>
    %11 = vector.shape_cast %10 : vector<1x24x104xf32> to vector<24x104xf32>
    %12 = vector.extract_strided_slice %9 {offsets = [0, 0], sizes = [104, 16], strides = [1, 1]} : vector<104x144xf32> to vector<104x16xf32>
    %cst_12 = arith.constant dense<0.000000e+00> : vector<24x16xf32>
    %13 = tpu.matmul %11, %12, %cst_12 {dimension_numbers = #tpu.dot_dimension_numbers<[1], [0], [0], [1], [0, 0, 1, 1], [], []>} : vector<24x104xf32>, vector<104x16xf32>, vector<24x16xf32> -> vector<24x16xf32>
    %c1 = arith.constant 1 : index
    %c0_13 = arith.constant 0 : index
    %c0_14 = arith.constant 0 : index
    %14 = vector.load %arg6[%c1, %c0_13, %c0_14] : memref<9x24x104xf32, #tpu.memory_space<vmem>>, vector<1x24x104xf32>
    %15 = vector.shape_cast %14 : vector<1x24x104xf32> to vector<24x104xf32>
    %16 = vector.extract_strided_slice %9 {offsets = [0, 16], sizes = [104, 16], strides = [1, 1]} : vector<104x144xf32> to vector<104x16xf32>
    %cst_15 = arith.constant dense<0.000000e+00> : vector<24x16xf32>
    %17 = tpu.matmul %15, %16, %cst_15 {dimension_numbers = #tpu.dot_dimension_numbers<[1], [0], [0], [1], [0, 0, 1, 1], [], []>} : vector<24x104xf32>, vector<104x16xf32>, vector<24x16xf32> -> vector<24x16xf32>
    %c2 = arith.constant 2 : index
    %c0_16 = arith.constant 0 : index
    %c0_17 = arith.constant 0 : index
    %18 = vector.load %arg6[%c2, %c0_16, %c0_17] : memref<9x24x104xf32, #tpu.memory_space<vmem>>, vector<1x24x104xf32>
    %19 = vector.shape_cast %18 : vector<1x24x104xf32> to vector<24x104xf32>
    %20 = vector.extract_strided_slice %9 {offsets = [0, 32], sizes = [104, 16], strides = [1, 1]} : vector<104x144xf32> to vector<104x16xf32>
    %cst_18 = arith.constant dense<0.000000e+00> : vector<24x16xf32>
    %21 = tpu.matmul %19, %20, %cst_18 {dimension_numbers = #tpu.dot_dimension_numbers<[1], [0], [0], [1], [0, 0, 1, 1], [], []>} : vector<24x104xf32>, vector<104x16xf32>, vector<24x16xf32> -> vector<24x16xf32>
    %c3 = arith.constant 3 : index
    %c0_19 = arith.constant 0 : index
    %c0_20 = arith.constant 0 : index
    %22 = vector.load %arg6[%c3, %c0_19, %c0_20] : memref<9x24x104xf32, #tpu.memory_space<vmem>>, vector<1x24x104xf32>
    %23 = vector.shape_cast %22 : vector<1x24x104xf32> to vector<24x104xf32>
    %24 = vector.extract_strided_slice %9 {offsets = [0, 48], sizes = [104, 16], strides = [1, 1]} : vector<104x144xf32> to vector<104x16xf32>
    %cst_21 = arith.constant dense<0.000000e+00> : vector<24x16xf32>
    %25 = tpu.matmul %23, %24, %cst_21 {dimension_numbers = #tpu.dot_dimension_numbers<[1], [0], [0], [1], [0, 0, 1, 1], [], []>} : vector<24x104xf32>, vector<104x16xf32>, vector<24x16xf32> -> vector<24x16xf32>
    %26 = arith.addf %13, %25 : vector<24x16xf32>
    %c4 = arith.constant 4 : index
    %c0_22 = arith.constant 0 : index
    %c0_23 = arith.constant 0 : index
    %27 = vector.load %arg6[%c4, %c0_22, %c0_23] : memref<9x24x104xf32, #tpu.memory_space<vmem>>, vector<1x24x104xf32>
    %28 = vector.shape_cast %27 : vector<1x24x104xf32> to vector<24x104xf32>
    %29 = vector.extract_strided_slice %9 {offsets = [0, 64], sizes = [104, 16], strides = [1, 1]} : vector<104x144xf32> to vector<104x16xf32>
    %cst_24 = arith.constant dense<0.000000e+00> : vector<24x16xf32>
    %30 = tpu.matmul %28, %29, %cst_24 {dimension_numbers = #tpu.dot_dimension_numbers<[1], [0], [0], [1], [0, 0, 1, 1], [], []>} : vector<24x104xf32>, vector<104x16xf32>, vector<24x16xf32> -> vector<24x16xf32>
    %31 = arith.addf %17, %30 : vector<24x16xf32>
    %c5 = arith.constant 5 : index
    %c0_25 = arith.constant 0 : index
    %c0_26 = arith.constant 0 : index
    %32 = vector.load %arg6[%c5, %c0_25, %c0_26] : memref<9x24x104xf32, #tpu.memory_space<vmem>>, vector<1x24x104xf32>
    %33 = vector.shape_cast %32 : vector<1x24x104xf32> to vector<24x104xf32>
    %34 = vector.extract_strided_slice %9 {offsets = [0, 80], sizes = [104, 16], strides = [1, 1]} : vector<104x144xf32> to vector<104x16xf32>
    %cst_27 = arith.constant dense<0.000000e+00> : vector<24x16xf32>
    %35 = tpu.matmul %33, %34, %cst_27 {dimension_numbers = #tpu.dot_dimension_numbers<[1], [0], [0], [1], [0, 0, 1, 1], [], []>} : vector<24x104xf32>, vector<104x16xf32>, vector<24x16xf32> -> vector<24x16xf32>
    %36 = arith.addf %21, %35 : vector<24x16xf32>
    %c6 = arith.constant 6 : index
    %c0_28 = arith.constant 0 : index
    %c0_29 = arith.constant 0 : index
    %37 = vector.load %arg6[%c6, %c0_28, %c0_29] : memref<9x24x104xf32, #tpu.memory_space<vmem>>, vector<1x24x104xf32>
    %38 = vector.shape_cast %37 : vector<1x24x104xf32> to vector<24x104xf32>
    %39 = vector.extract_strided_slice %9 {offsets = [0, 96], sizes = [104, 16], strides = [1, 1]} : vector<104x144xf32> to vector<104x16xf32>
    %cst_30 = arith.constant dense<0.000000e+00> : vector<24x16xf32>
    %40 = tpu.matmul %38, %39, %cst_30 {dimension_numbers = #tpu.dot_dimension_numbers<[1], [0], [0], [1], [0, 0, 1, 1], [], []>} : vector<24x104xf32>, vector<104x16xf32>, vector<24x16xf32> -> vector<24x16xf32>
    %41 = arith.addf %26, %40 : vector<24x16xf32>
    %c7 = arith.constant 7 : index
    %c0_31 = arith.constant 0 : index
    %c0_32 = arith.constant 0 : index
    %42 = vector.load %arg6[%c7, %c0_31, %c0_32] : memref<9x24x104xf32, #tpu.memory_space<vmem>>, vector<1x24x104xf32>
    %43 = vector.shape_cast %42 : vector<1x24x104xf32> to vector<24x104xf32>
    %44 = vector.extract_strided_slice %9 {offsets = [0, 112], sizes = [104, 16], strides = [1, 1]} : vector<104x144xf32> to vector<104x16xf32>
    %cst_33 = arith.constant dense<0.000000e+00> : vector<24x16xf32>
    %45 = tpu.matmul %43, %44, %cst_33 {dimension_numbers = #tpu.dot_dimension_numbers<[1], [0], [0], [1], [0, 0, 1, 1], [], []>} : vector<24x104xf32>, vector<104x16xf32>, vector<24x16xf32> -> vector<24x16xf32>
    %46 = arith.addf %31, %45 : vector<24x16xf32>
    %c8 = arith.constant 8 : index
    %c0_34 = arith.constant 0 : index
    %c0_35 = arith.constant 0 : index
    %47 = vector.load %arg6[%c8, %c0_34, %c0_35] : memref<9x24x104xf32, #tpu.memory_space<vmem>>, vector<1x24x104xf32>
    %48 = vector.shape_cast %47 : vector<1x24x104xf32> to vector<24x104xf32>
    %49 = vector.extract_strided_slice %9 {offsets = [0, 128], sizes = [104, 16], strides = [1, 1]} : vector<104x144xf32> to vector<104x16xf32>
    %cst_36 = arith.constant dense<0.000000e+00> : vector<24x16xf32>
    %50 = tpu.matmul %48, %49, %cst_36 {dimension_numbers = #tpu.dot_dimension_numbers<[1], [0], [0], [1], [0, 0, 1, 1], [], []>} : vector<24x104xf32>, vector<104x16xf32>, vector<24x16xf32> -> vector<24x16xf32>
    %51 = arith.addf %36, %50 : vector<24x16xf32>
    %52 = arith.addf %41, %46 : vector<24x16xf32>
    %53 = arith.addf %52, %51 : vector<24x16xf32>
    %c0_37 = arith.constant 0 : index
    %c0_38 = arith.constant 0 : index
    %54 = vector.load %arg5[%c0_37, %c0_38] : memref<1x16xf32, #tpu.memory_space<vmem>>, vector<1x16xf32>
    %55 = vector.broadcast %54 : vector<1x16xf32> to vector<24x16xf32>
    %56 = arith.addf %53, %55 : vector<24x16xf32>
    %cst_39 = arith.constant 0.000000e+00 : f32
    %57 = vector.broadcast %cst_39 : f32 to vector<24x16xf32>
    %58 = arith.maximumf %56, %57 : vector<24x16xf32>
    %c0_40 = arith.constant 0 : index
    %c0_41 = arith.constant 0 : index
    %59 = vector.load %arg1[%c0_40, %c0_41] : memref<2x6xf32, #tpu.memory_space<vmem>>, vector<2x6xf32>
    %c0_42 = arith.constant 0 : index
    %c0_43 = arith.constant 0 : index
    %60 = vector.load %arg7[%c0_42, %c0_43] : memref<6x16xf32, #tpu.memory_space<vmem>>, vector<6x16xf32>
    %cst_44 = arith.constant dense<0.000000e+00> : vector<2x16xf32>
    %61 = tpu.matmul %59, %60, %cst_44 {dimension_numbers = #tpu.dot_dimension_numbers<[1], [0], [0], [1], [0, 0, 1, 1], [], []>} : vector<2x6xf32>, vector<6x16xf32>, vector<2x16xf32> -> vector<2x16xf32>
    %c0_45 = arith.constant 0 : index
    %c0_46 = arith.constant 0 : index
    %62 = vector.load %arg8[%c0_45, %c0_46] : memref<1x16xf32, #tpu.memory_space<vmem>>, vector<1x16xf32>
    %63 = vector.broadcast %62 : vector<1x16xf32> to vector<2x16xf32>
    %64 = arith.addf %61, %63 : vector<2x16xf32>
    %cst_47 = arith.constant 0.000000e+00 : f32
    %65 = vector.broadcast %cst_47 : f32 to vector<2x16xf32>
    %66 = arith.maximumf %64, %65 : vector<2x16xf32>
    %c0_48 = arith.constant 0 : index
    %c0_49 = arith.constant 0 : index
    %67 = vector.load %arg9[%c0_48, %c0_49] : memref<16x128xf32, #tpu.memory_space<vmem>>, vector<16x128xf32>
    %cst_50 = arith.constant dense<0.000000e+00> : vector<2x128xf32>
    %68 = tpu.matmul %66, %67, %cst_50 {dimension_numbers = #tpu.dot_dimension_numbers<[1], [0], [0], [1], [0, 0, 1, 1], [], []>} : vector<2x16xf32>, vector<16x128xf32>, vector<2x128xf32> -> vector<2x128xf32>
    %c0_51 = arith.constant 0 : index
    %c0_52 = arith.constant 0 : index
    %69 = vector.load %arg11[%c0_51, %c0_52] : memref<1x128xf32, #tpu.memory_space<vmem>>, vector<1x128xf32>
    %70 = vector.broadcast %69 : vector<1x128xf32> to vector<2x128xf32>
    %71 = arith.addf %68, %70 : vector<2x128xf32>
    %72 = vector.extract_strided_slice %58 {offsets = [0, 0], sizes = [2, 16], strides = [1, 1]} : vector<24x16xf32> to vector<2x16xf32>
    %c0_53 = arith.constant 0 : index
    %c0_54 = arith.constant 0 : index
    %c0_55 = arith.constant 0 : index
    %73 = vector.load %arg10[%c0_53, %c0_54, %c0_55] : memref<9x16x128xf32, #tpu.memory_space<vmem>>, vector<1x16x128xf32>
    %74 = vector.shape_cast %73 : vector<1x16x128xf32> to vector<16x128xf32>
    %cst_56 = arith.constant dense<0.000000e+00> : vector<2x128xf32>
    %75 = tpu.matmul %72, %74, %cst_56 {dimension_numbers = #tpu.dot_dimension_numbers<[1], [0], [0], [1], [0, 0, 1, 1], [], []>} : vector<2x16xf32>, vector<16x128xf32>, vector<2x128xf32> -> vector<2x128xf32>
    %76 = arith.addf %71, %75 : vector<2x128xf32>
    %77 = vector.extract_strided_slice %58 {offsets = [2, 0], sizes = [2, 16], strides = [1, 1]} : vector<24x16xf32> to vector<2x16xf32>
    %c1_57 = arith.constant 1 : index
    %c0_58 = arith.constant 0 : index
    %c0_59 = arith.constant 0 : index
    %78 = vector.load %arg10[%c1_57, %c0_58, %c0_59] : memref<9x16x128xf32, #tpu.memory_space<vmem>>, vector<1x16x128xf32>
    %79 = vector.shape_cast %78 : vector<1x16x128xf32> to vector<16x128xf32>
    %cst_60 = arith.constant dense<0.000000e+00> : vector<2x128xf32>
    %80 = tpu.matmul %77, %79, %cst_60 {dimension_numbers = #tpu.dot_dimension_numbers<[1], [0], [0], [1], [0, 0, 1, 1], [], []>} : vector<2x16xf32>, vector<16x128xf32>, vector<2x128xf32> -> vector<2x128xf32>
    %81 = vector.extract_strided_slice %58 {offsets = [4, 0], sizes = [2, 16], strides = [1, 1]} : vector<24x16xf32> to vector<2x16xf32>
    %c2_61 = arith.constant 2 : index
    %c0_62 = arith.constant 0 : index
    %c0_63 = arith.constant 0 : index
    %82 = vector.load %arg10[%c2_61, %c0_62, %c0_63] : memref<9x16x128xf32, #tpu.memory_space<vmem>>, vector<1x16x128xf32>
    %83 = vector.shape_cast %82 : vector<1x16x128xf32> to vector<16x128xf32>
    %cst_64 = arith.constant dense<0.000000e+00> : vector<2x128xf32>
    %84 = tpu.matmul %81, %83, %cst_64 {dimension_numbers = #tpu.dot_dimension_numbers<[1], [0], [0], [1], [0, 0, 1, 1], [], []>} : vector<2x16xf32>, vector<16x128xf32>, vector<2x128xf32> -> vector<2x128xf32>
    %85 = vector.extract_strided_slice %58 {offsets = [6, 0], sizes = [2, 16], strides = [1, 1]} : vector<24x16xf32> to vector<2x16xf32>
    %c3_65 = arith.constant 3 : index
    %c0_66 = arith.constant 0 : index
    %c0_67 = arith.constant 0 : index
    %86 = vector.load %arg10[%c3_65, %c0_66, %c0_67] : memref<9x16x128xf32, #tpu.memory_space<vmem>>, vector<1x16x128xf32>
    %87 = vector.shape_cast %86 : vector<1x16x128xf32> to vector<16x128xf32>
    %cst_68 = arith.constant dense<0.000000e+00> : vector<2x128xf32>
    %88 = tpu.matmul %85, %87, %cst_68 {dimension_numbers = #tpu.dot_dimension_numbers<[1], [0], [0], [1], [0, 0, 1, 1], [], []>} : vector<2x16xf32>, vector<16x128xf32>, vector<2x128xf32> -> vector<2x128xf32>
    %89 = arith.addf %76, %88 : vector<2x128xf32>
    %90 = vector.extract_strided_slice %58 {offsets = [8, 0], sizes = [2, 16], strides = [1, 1]} : vector<24x16xf32> to vector<2x16xf32>
    %c4_69 = arith.constant 4 : index
    %c0_70 = arith.constant 0 : index
    %c0_71 = arith.constant 0 : index
    %91 = vector.load %arg10[%c4_69, %c0_70, %c0_71] : memref<9x16x128xf32, #tpu.memory_space<vmem>>, vector<1x16x128xf32>
    %92 = vector.shape_cast %91 : vector<1x16x128xf32> to vector<16x128xf32>
    %cst_72 = arith.constant dense<0.000000e+00> : vector<2x128xf32>
    %93 = tpu.matmul %90, %92, %cst_72 {dimension_numbers = #tpu.dot_dimension_numbers<[1], [0], [0], [1], [0, 0, 1, 1], [], []>} : vector<2x16xf32>, vector<16x128xf32>, vector<2x128xf32> -> vector<2x128xf32>
    %94 = arith.addf %80, %93 : vector<2x128xf32>
    %95 = vector.extract_strided_slice %58 {offsets = [10, 0], sizes = [2, 16], strides = [1, 1]} : vector<24x16xf32> to vector<2x16xf32>
    %c5_73 = arith.constant 5 : index
    %c0_74 = arith.constant 0 : index
    %c0_75 = arith.constant 0 : index
    %96 = vector.load %arg10[%c5_73, %c0_74, %c0_75] : memref<9x16x128xf32, #tpu.memory_space<vmem>>, vector<1x16x128xf32>
    %97 = vector.shape_cast %96 : vector<1x16x128xf32> to vector<16x128xf32>
    %cst_76 = arith.constant dense<0.000000e+00> : vector<2x128xf32>
    %98 = tpu.matmul %95, %97, %cst_76 {dimension_numbers = #tpu.dot_dimension_numbers<[1], [0], [0], [1], [0, 0, 1, 1], [], []>} : vector<2x16xf32>, vector<16x128xf32>, vector<2x128xf32> -> vector<2x128xf32>
    %99 = arith.addf %84, %98 : vector<2x128xf32>
    %100 = vector.extract_strided_slice %58 {offsets = [12, 0], sizes = [2, 16], strides = [1, 1]} : vector<24x16xf32> to vector<2x16xf32>
    %c6_77 = arith.constant 6 : index
    %c0_78 = arith.constant 0 : index
    %c0_79 = arith.constant 0 : index
    %101 = vector.load %arg10[%c6_77, %c0_78, %c0_79] : memref<9x16x128xf32, #tpu.memory_space<vmem>>, vector<1x16x128xf32>
    %102 = vector.shape_cast %101 : vector<1x16x128xf32> to vector<16x128xf32>
    %cst_80 = arith.constant dense<0.000000e+00> : vector<2x128xf32>
    %103 = tpu.matmul %100, %102, %cst_80 {dimension_numbers = #tpu.dot_dimension_numbers<[1], [0], [0], [1], [0, 0, 1, 1], [], []>} : vector<2x16xf32>, vector<16x128xf32>, vector<2x128xf32> -> vector<2x128xf32>
    %104 = arith.addf %89, %103 : vector<2x128xf32>
    %105 = vector.extract_strided_slice %58 {offsets = [14, 0], sizes = [2, 16], strides = [1, 1]} : vector<24x16xf32> to vector<2x16xf32>
    %c7_81 = arith.constant 7 : index
    %c0_82 = arith.constant 0 : index
    %c0_83 = arith.constant 0 : index
    %106 = vector.load %arg10[%c7_81, %c0_82, %c0_83] : memref<9x16x128xf32, #tpu.memory_space<vmem>>, vector<1x16x128xf32>
    %107 = vector.shape_cast %106 : vector<1x16x128xf32> to vector<16x128xf32>
    %cst_84 = arith.constant dense<0.000000e+00> : vector<2x128xf32>
    %108 = tpu.matmul %105, %107, %cst_84 {dimension_numbers = #tpu.dot_dimension_numbers<[1], [0], [0], [1], [0, 0, 1, 1], [], []>} : vector<2x16xf32>, vector<16x128xf32>, vector<2x128xf32> -> vector<2x128xf32>
    %109 = arith.addf %94, %108 : vector<2x128xf32>
    %110 = vector.extract_strided_slice %58 {offsets = [16, 0], sizes = [2, 16], strides = [1, 1]} : vector<24x16xf32> to vector<2x16xf32>
    %c8_85 = arith.constant 8 : index
    %c0_86 = arith.constant 0 : index
    %c0_87 = arith.constant 0 : index
    %111 = vector.load %arg10[%c8_85, %c0_86, %c0_87] : memref<9x16x128xf32, #tpu.memory_space<vmem>>, vector<1x16x128xf32>
    %112 = vector.shape_cast %111 : vector<1x16x128xf32> to vector<16x128xf32>
    %cst_88 = arith.constant dense<0.000000e+00> : vector<2x128xf32>
    %113 = tpu.matmul %110, %112, %cst_88 {dimension_numbers = #tpu.dot_dimension_numbers<[1], [0], [0], [1], [0, 0, 1, 1], [], []>} : vector<2x16xf32>, vector<16x128xf32>, vector<2x128xf32> -> vector<2x128xf32>
    %114 = arith.addf %99, %113 : vector<2x128xf32>
    %115 = arith.addf %104, %109 : vector<2x128xf32>
    %116 = arith.addf %115, %114 : vector<2x128xf32>
    %cst_89 = arith.constant 0.000000e+00 : f32
    %117 = vector.broadcast %cst_89 : f32 to vector<2x128xf32>
    %118 = arith.maximumf %116, %117 : vector<2x128xf32>
    %c0_90 = arith.constant 0 : index
    %c0_91 = arith.constant 0 : index
    %119 = vector.load %arg12[%c0_90, %c0_91] : memref<128x128xf32, #tpu.memory_space<vmem>>, vector<128x128xf32>
    %cst_92 = arith.constant dense<0.000000e+00> : vector<2x128xf32>
    %120 = tpu.matmul %118, %119, %cst_92 {dimension_numbers = #tpu.dot_dimension_numbers<[1], [0], [0], [1], [0, 0, 1, 1], [], []>} : vector<2x128xf32>, vector<128x128xf32>, vector<2x128xf32> -> vector<2x128xf32>
    %c0_93 = arith.constant 0 : index
    %c0_94 = arith.constant 0 : index
    %121 = vector.load %arg13[%c0_93, %c0_94] : memref<1x128xf32, #tpu.memory_space<vmem>>, vector<1x128xf32>
    %122 = vector.broadcast %121 : vector<1x128xf32> to vector<2x128xf32>
    %123 = arith.addf %120, %122 : vector<2x128xf32>
    %c0_95 = arith.constant 0 : index
    %c0_96 = arith.constant 0 : index
    %124 = vector.load %arg14[%c0_95, %c0_96] : memref<2x128xf32, #tpu.memory_space<vmem>>, vector<2x128xf32>
    tpu.vector_store %arg14[%c0_95, %c0_96], %123 {strides = array<i32>} : memref<2x128xf32, #tpu.memory_space<vmem>>, vector<2x128xf32>,
    return
  }
}

</mosaic_0001>

<llo_original>
// kernel: branch_dddqn_forward.1
$region0: #{branch_dddqn_forward.1}
  #allocation0 [shape = 'u32[]', space=smem, size = 0x4, offset = 0x4, fixed_abs, tag = 'smem constant byte address 0x4 - core index']
  #allocation1 [shape = 'u32[144,128]{1,0:T(1,128)}', space=vmem, size = 0x12000, scoped, tag = 'internal scratch']
  %s0 = inlined_call_operand.vmem [shape: f32[104,64], index: 0, kind: input, shape index: {}]
  %s1 = inlined_call_operand.vmem [shape: f32[2,6], index: 1, kind: input, shape index: {}]
  %s2 = inlined_call_operand.vmem [shape: f32[64,8], index: 2, kind: input, shape index: {}]
  %s3 = inlined_call_operand.vmem [shape: f32[1,8], index: 3, kind: input, shape index: {}]
  %s4 = inlined_call_operand.vmem [shape: f32[8,144], index: 4, kind: input, shape index: {}]
  %s5 = inlined_call_operand.vmem [shape: f32[1,16], index: 5, kind: input, shape index: {}]
  %s6 = inlined_call_operand.vmem [shape: f32[9,24,104], index: 6, kind: input, shape index: {}]
  %s7 = inlined_call_operand.vmem [shape: f32[6,16], index: 7, kind: input, shape index: {}]
  %s8 = inlined_call_operand.vmem [shape: f32[1,16], index: 8, kind: input, shape index: {}]
  %s9 = inlined_call_operand.vmem [shape: f32[16,128], index: 9, kind: input, shape index: {}]
  %s10 = inlined_call_operand.vmem [shape: f32[9,16,128], index: 10, kind: input, shape index: {}]
  %s11 = inlined_call_operand.vmem [shape: f32[1,128], index: 11, kind: input, shape index: {}]
  %s12 = inlined_call_operand.vmem [shape: f32[128,128], index: 12, kind: input, shape index: {}]
  %s13 = inlined_call_operand.vmem [shape: f32[1,128], index: 13, kind: input, shape index: {}]
  %s14 = inlined_call_operand.hbm [shape: f32[2,128], index: 14, kind: output, shape index: {}]
  %s15 = sld [smem:[#allocation0]]
  $region66: #{branch_dddqn_forward.1} parent=0
    _
  %s17 = ssub.s32 1, %s15
  %s18 = scalar_select 0, %s17, %s15
  $region1: #{branch_dddqn_forward.1} parent=0
    #allocation2 [shape = 'u8[1024]{0}', space=vmem, size = 0x400, scoped, tag = 'output window, operand 0, single buffered']
    #allocation3 [shape = 's32[1]{0}', space=sflag, size = 0x4, scoped, tag = 'scoped memory for branch_dddqn_forward.1']
    %19 = vsyncpa [#allocation3], 0
    // Predicated region
    $region2: #{branch_dddqn_forward.1} parent=1 // pred_check
      _
    $region3: #{branch_dddqn_forward.1} parent=1 // pred_check_branch
      %21 = sbr.rel (0) target = $region5
    $region4: #{branch_dddqn_forward.1} parent=1 // pred_region
      _
    $region5: #{branch_dddqn_forward.1} parent=1 // pred_fallthru
      _
    // Predicated region
    $region6: #{branch_dddqn_forward.1} parent=1 // pred_check
      _
    $region7: #{branch_dddqn_forward.1} parent=1 // pred_check_branch
      %23 = sbr.rel (0) target = $region9
    $region8: #{branch_dddqn_forward.1} parent=1 // pred_region
      _
    $region9: #{branch_dddqn_forward.1} parent=1 // pred_fallthru
      _
    // Predicated region
    $region10: #{branch_dddqn_forward.1} parent=1 // pred_check
      _
    $region11: #{branch_dddqn_forward.1} parent=1 // pred_check_branch
      %25 = sbr.rel (0) target = $region13
    $region12: #{branch_dddqn_forward.1} parent=1 // pred_region
      _
    $region13: #{branch_dddqn_forward.1} parent=1 // pred_fallthru
      _
    // Predicated region
    $region14: #{branch_dddqn_forward.1} parent=1 // pred_check
      _
    $region15: #{branch_dddqn_forward.1} parent=1 // pred_check_branch
      %27 = sbr.rel (0) target = $region17
    $region16: #{branch_dddqn_forward.1} parent=1 // pred_region
      _
    $region17: #{branch_dddqn_forward.1} parent=1 // pred_fallthru
      _
    // Predicated region
    $region18: #{branch_dddqn_forward.1} parent=1 // pred_check
      _
    $region19: #{branch_dddqn_forward.1} parent=1 // pred_check_branch
      %29 = sbr.rel (0) target = $region21
    $region20: #{branch_dddqn_forward.1} parent=1 // pred_region
      _
    $region21: #{branch_dddqn_forward.1} parent=1 // pred_fallthru
      _
    // Predicated region
    $region22: #{branch_dddqn_forward.1} parent=1 // pred_check
      _
    $region23: #{branch_dddqn_forward.1} parent=1 // pred_check_branch
      %31 = sbr.rel (0) target = $region25
    $region24: #{branch_dddqn_forward.1} parent=1 // pred_region
      _
    $region25: #{branch_dddqn_forward.1} parent=1 // pred_fallthru
      _
    // Predicated region
    $region26: #{branch_dddqn_forward.1} parent=1 // pred_check
      _
    $region27: #{branch_dddqn_forward.1} parent=1 // pred_check_branch
      %33 = sbr.rel (0) target = $region29
    $region28: #{branch_dddqn_forward.1} parent=1 // pred_region
      _
    $region29: #{branch_dddqn_forward.1} parent=1 // pred_fallthru
      _
    // Predicated region
    $region30: #{branch_dddqn_forward.1} parent=1 // pred_check
      _
    $region31: #{branch_dddqn_forward.1} parent=1 // pred_check_branch
      %35 = sbr.rel (0) target = $region33
    $region32: #{branch_dddqn_forward.1} parent=1 // pred_region
      _
    $region33: #{branch_dddqn_forward.1} parent=1 // pred_fallthru
      _
    // Predicated region
    $region34: #{branch_dddqn_forward.1} parent=1 // pred_check
      _
    $region35: #{branch_dddqn_forward.1} parent=1 // pred_check_branch
      %37 = sbr.rel (0) target = $region37
    $region36: #{branch_dddqn_forward.1} parent=1 // pred_region
      _
    $region37: #{branch_dddqn_forward.1} parent=1 // pred_fallthru
      _
    // Predicated region
    $region38: #{branch_dddqn_forward.1} parent=1 // pred_check
      _
    $region39: #{branch_dddqn_forward.1} parent=1 // pred_check_branch
      %39 = sbr.rel (0) target = $region41
    $region40: #{branch_dddqn_forward.1} parent=1 // pred_region
      _
    $region41: #{branch_dddqn_forward.1} parent=1 // pred_fallthru
      _
    // Predicated region
    $region42: #{branch_dddqn_forward.1} parent=1 // pred_check
      _
    $region43: #{branch_dddqn_forward.1} parent=1 // pred_check_branch
      %41 = sbr.rel (0) target = $region45
    $region44: #{branch_dddqn_forward.1} parent=1 // pred_region
      _
    $region45: #{branch_dddqn_forward.1} parent=1 // pred_fallthru
      _
    // Predicated region
    $region46: #{branch_dddqn_forward.1} parent=1 // pred_check
      _
    $region47: #{branch_dddqn_forward.1} parent=1 // pred_check_branch
      %43 = sbr.rel (0) target = $region49
    $region48: #{branch_dddqn_forward.1} parent=1 // pred_region
      _
    $region49: #{branch_dddqn_forward.1} parent=1 // pred_fallthru
      _
    // Predicated region
    $region50: #{branch_dddqn_forward.1} parent=1 // pred_check
      _
    $region51: #{branch_dddqn_forward.1} parent=1 // pred_check_branch
      %45 = sbr.rel (0) target = $region53
    $region52: #{branch_dddqn_forward.1} parent=1 // pred_region
      _
    $region53: #{branch_dddqn_forward.1} parent=1 // pred_fallthru
      _
    // Predicated region
    $region54: #{branch_dddqn_forward.1} parent=1 // pred_check
      _
    $region55: #{branch_dddqn_forward.1} parent=1 // pred_check_branch
      %47 = sbr.rel (0) target = $region57
    $region56: #{branch_dddqn_forward.1} parent=1 // pred_region
      _
    $region57: #{branch_dddqn_forward.1} parent=1 // pred_fallthru
      _
    %v48 = vld [vmem:[%s0] sm:$0xff]
    %v49 = vld [vmem:[%s0 + $0x8] sm:$0xff]
    %v50 = vld [vmem:[%s0 + $0x10] sm:$0xff]
    %v51 = vld [vmem:[%s0 + $0x18] sm:$0xff]
    %v52 = vld [vmem:[%s0 + $0x20] sm:$0xff]
    %v53 = vld [vmem:[%s0 + $0x28] sm:$0xff]
    %v54 = vld [vmem:[%s0 + $0x30] sm:$0xff]
    %v55 = vld [vmem:[%s0 + $0x38] sm:$0xff]
    %v56 = vld [vmem:[%s0 + $0x40] sm:$0xff]
    %v57 = vld [vmem:[%s0 + $0x48] sm:$0xff]
    %v58 = vld [vmem:[%s0 + $0x50] sm:$0xff]
    %v59 = vld [vmem:[%s0 + $0x58] sm:$0xff]
    %v60 = vld [vmem:[%s0 + $0x60] sm:$0xff]
    %v61 = vld [vmem:[%s2] sm:$0xff]
    %v62 = vld [vmem:[%s2 + $0x8] sm:$0xff]
    %v63 = vld [vmem:[%s2 + $0x10] sm:$0xff]
    %v64 = vld [vmem:[%s2 + $0x18] sm:$0xff]
    %v65 = vld [vmem:[%s2 + $0x20] sm:$0xff]
    %v66 = vld [vmem:[%s2 + $0x28] sm:$0xff]
    %v67 = vld [vmem:[%s2 + $0x30] sm:$0xff]
    %v68 = vld [vmem:[%s2 + $0x38] sm:$0xff]
    %v69 = vld [vmem:[%s3] sm:$0x1]
    %v71 = vlaneseq
    %v72 = vshrl.u32 %v71, 7
    %v73 = vsub.s32 0, %v72
    %v74 = vrot.slane %v69, %v73
    %vm76 = vcmask 523264
    %v78 = vsel %vm76, %v48, 0
    %v81 = vsel %vm76, %v49, 0
    %v84 = vsel %vm76, %v50, 0
    %v87 = vsel %vm76, %v51, 0
    %v90 = vsel %vm76, %v52, 0
    %v93 = vsel %vm76, %v53, 0
    %v96 = vsel %vm76, %v54, 0
    %v99 = vsel %vm76, %v55, 0
    %v102 = vsel %vm76, %v56, 0
    %v105 = vsel %vm76, %v57, 0
    %v108 = vsel %vm76, %v58, 0
    %v111 = vsel %vm76, %v59, 0
    %v114 = vsel %vm76, %v60, 0
    %116 = vmatprep.subr.mxu0 0.0
    %117 = vmatpush1.msra.mxu0 %v61
    %118 = vmatprep.subr.mxu0 0.0
    %119 = vmatpush1.msra.mxu0 %v62
    %120 = vmatprep.subr.mxu0 0.0
    %121 = vmatpush1.msra.mxu0 %v63
    %122 = vmatprep.subr.mxu0 0.0
    %123 = vmatpush1.msra.mxu0 %v64
    %124 = vmatprep.subr.mxu0 0.0
    %125 = vmatpush1.msra.mxu0 %v65
    %126 = vmatprep.subr.mxu0 0.0
    %127 = vmatpush1.msra.mxu0 %v66
    %128 = vmatprep.subr.mxu0 0.0
    %129 = vmatpush1.msra.mxu0 %v67
    %130 = vmatprep.subr.mxu0 0.0
    %131 = vmatpush1.msra.mxu0 %v68
    %132 = vmatprep.subr.mxu0 0.0
    %133 = vmatpush1.msra.mxu0 0.0
    %134 = vmatprep.subr.mxu0 0.0
    %135 = vmatpush1.msra.mxu0 0.0
    %136 = vmatprep.subr.mxu0 0.0
    %137 = vmatpush1.msra.mxu0 0.0
    %138 = vmatprep.subr.mxu0 0.0
    %139 = vmatpush1.msra.mxu0 0.0
    %140 = vmatprep.subr.mxu0 0.0
    %141 = vmatpush1.msra.mxu0 0.0
    %142 = vmatprep.subr.mxu0 0.0
    %143 = vmatpush1.msra.mxu0 0.0
    %144 = vmatprep.subr.mxu0 0.0
    %145 = vmatpush1.msra.mxu0 0.0
    %146 = vmatprep.subr.mxu0 0.0
    %147 = vmatpush1.msra.mxu0 0.0
    %148 = vmatprep.subr.mxu0 0.0
    %149 = vmatpush1.msra.mxu0 0.0
    %150 = vmatprep.subr.mxu0 0.0
    %151 = vmatpush1.msra.mxu0 0.0
    %152 = vmatprep.subr.mxu0 0.0
    %153 = vmatpush1.msra.mxu0 0.0
    %154 = vmatprep.subr.mxu0 0.0
    %155 = vmatpush1.msra.mxu0 0.0
    %156 = vmatprep.subr.mxu0 0.0
    %157 = vmatpush1.msra.mxu0 0.0
    %158 = vmatprep.subr.mxu0 0.0
    %159 = vmatpush1.msra.mxu0 0.0
    %160 = vmatprep.subr.mxu0 0.0
    %161 = vmatpush1.msra.mxu0 0.0
    %162 = vmatprep.subr.mxu0 0.0
    %163 = vmatpush1.msra.mxu0 0.0
    %164 = vmatprep.subr.mxu0 0.0
    %165 = vmatpush1.msra.mxu0 0.0
    %166 = vmatprep.subr.mxu0 0.0
    %167 = vmatpush1.msra.mxu0 0.0
    %168 = vmatprep.subr.mxu0 0.0
    %169 = vmatpush1.msra.mxu0 0.0
    %170 = vmatprep.subr.mxu0 0.0
    %171 = vmatpush1.msra.mxu0 0.0
    %172 = vmatprep.subr.mxu0 0.0
    %173 = vmatpush1.msra.mxu0 0.0
    %174 = vmatprep.subr.mxu0 0.0
    %175 = vmatpush1.msra.mxu0 0.0
    %176 = vmatprep.subr.mxu0 0.0
    %177 = vmatpush1.msra.mxu0 0.0
    %178 = vmatprep.subr.mxu0 0.0
    %179 = vmatpush1.msra.mxu0 0.0
    %180 = vmatprep.mubr.f32.mxu0 0.0
    %181 = vmatmul.mubr.f32.gmra.mrb[0].mxu0 %v78
    %v182 = vpop.f32.mrb[0].mxu0
    %v183 = vadd.f32 %v74, %v182
    %v184 = vpop.f32.mrb[0].mxu0
    %185 = vmatprep.mubr.f32.mxu0 0.0
    %186 = vmatmul.mubr.f32.gmra.mrb[0].mxu0 %v81
    %v187 = vpop.f32.mrb[0].mxu0
    %v188 = vadd.f32 %v74, %v187
    %v189 = vpop.f32.mrb[0].mxu0
    %190 = vmatprep.mubr.f32.mxu0 0.0
    %191 = vmatmul.mubr.f32.gmra.mrb[0].mxu0 %v84
    %v192 = vpop.f32.mrb[0].mxu0
    %v193 = vadd.f32 %v74, %v192
    %v194 = vpop.f32.mrb[0].mxu0
    %195 = vmatprep.mubr.f32.mxu0 0.0
    %196 = vmatmul.mubr.f32.gmra.mrb[0].mxu0 %v87
    %v197 = vpop.f32.mrb[0].mxu0
    %v198 = vadd.f32 %v74, %v197
    %v199 = vpop.f32.mrb[0].mxu0
    %200 = vmatprep.mubr.f32.mxu0 0.0
    %201 = vmatmul.mubr.f32.gmra.mrb[0].mxu0 %v90
    %v202 = vpop.f32.mrb[0].mxu0
    %v203 = vadd.f32 %v74, %v202
    %v204 = vpop.f32.mrb[0].mxu0
    %205 = vmatprep.mubr.f32.mxu0 0.0
    %206 = vmatmul.mubr.f32.gmra.mrb[0].mxu0 %v93
    %v207 = vpop.f32.mrb[0].mxu0
    %v208 = vadd.f32 %v74, %v207
    %v209 = vpop.f32.mrb[0].mxu0
    %210 = vmatprep.mubr.f32.mxu0 0.0
    %211 = vmatmul.mubr.f32.gmra.mrb[0].mxu0 %v96
    %v212 = vpop.f32.mrb[0].mxu0
    %v213 = vadd.f32 %v74, %v212
    %v214 = vpop.f32.mrb[0].mxu0
    %215 = vmatprep.mubr.f32.mxu0 0.0
    %216 = vmatmul.mubr.f32.gmra.mrb[0].mxu0 %v99
    %v217 = vpop.f32.mrb[0].mxu0
    %v218 = vadd.f32 %v74, %v217
    %v219 = vpop.f32.mrb[0].mxu0
    %220 = vmatprep.mubr.f32.mxu0 0.0
    %221 = vmatmul.mubr.f32.gmra.mrb[0].mxu0 %v102
    %v222 = vpop.f32.mrb[0].mxu0
    %v223 = vadd.f32 %v74, %v222
    %v224 = vpop.f32.mrb[0].mxu0
    %225 = vmatprep.mubr.f32.mxu0 0.0
    %226 = vmatmul.mubr.f32.gmra.mrb[0].mxu0 %v105
    %v227 = vpop.f32.mrb[0].mxu0
    %v228 = vadd.f32 %v74, %v227
    %v229 = vpop.f32.mrb[0].mxu0
    %230 = vmatprep.mubr.f32.mxu0 0.0
    %231 = vmatmul.mubr.f32.gmra.mrb[0].mxu0 %v108
    %v232 = vpop.f32.mrb[0].mxu0
    %v233 = vadd.f32 %v74, %v232
    %v234 = vpop.f32.mrb[0].mxu0
    %235 = vmatprep.mubr.f32.mxu0 0.0
    %236 = vmatmul.mubr.f32.gmra.mrb[0].mxu0 %v111
    %v237 = vpop.f32.mrb[0].mxu0
    %v238 = vadd.f32 %v74, %v237
    %v239 = vpop.f32.mrb[0].mxu0
    %240 = vmatprep.mubr.f32.mxu0 0.0
    %241 = vmatmul.mubr.f32.gmra.mrb[0].mxu0 %v114
    %v242 = vpop.f32.mrb[0].mxu0
    %v243 = vadd.f32 %v74, %v242
    %v244 = vpop.f32.mrb[0].mxu0
    %245 = vdwg.mxu0
    %v246 = vmax.f32 %v183, 0.0
    %v247 = vmax.f32 %v188, 0.0
    %v248 = vmax.f32 %v193, 0.0
    %v249 = vmax.f32 %v198, 0.0
    %v250 = vmax.f32 %v203, 0.0
    %v251 = vmax.f32 %v208, 0.0
    %v252 = vmax.f32 %v213, 0.0
    %v253 = vmax.f32 %v218, 0.0
    %v254 = vmax.f32 %v223, 0.0
    %v255 = vmax.f32 %v228, 0.0
    %v256 = vmax.f32 %v233, 0.0
    %v257 = vmax.f32 %v238, 0.0
    %v258 = vmax.f32 %v243, 0.0
    %v259 = vld [vmem:[%s4] sm:$0xff]
    %v260 = vld [vmem:[%s4 + $0x8] sm:$0xff]
    %vm261 = vcmask 64512
    %v263 = vsel %vm261, %v246, 0
    %v266 = vsel %vm261, %v247, 0
    %v269 = vsel %vm261, %v248, 0
    %v272 = vsel %vm261, %v249, 0
    %v275 = vsel %vm261, %v250, 0
    %v278 = vsel %vm261, %v251, 0
    %v281 = vsel %vm261, %v252, 0
    %v284 = vsel %vm261, %v253, 0
    %v287 = vsel %vm261, %v254, 0
    %v290 = vsel %vm261, %v255, 0
    %v293 = vsel %vm261, %v256, 0
    %v296 = vsel %vm261, %v257, 0
    %v299 = vsel %vm261, %v258, 0
    %301 = vmatprep.subr.mxu0 %v260
    %302 = vmatpush1.msra.mxu0 %v259
    %303 = vmatprep.subr.mxu0 0.0
    %304 = vmatpush1.msra.mxu0 0.0
    %305 = vmatprep.subr.mxu0 0.0
    %306 = vmatpush1.msra.mxu0 0.0
    %307 = vmatprep.subr.mxu0 0.0
    %308 = vmatpush1.msra.mxu0 0.0
    %309 = vmatprep.subr.mxu0 0.0
    %310 = vmatpush1.msra.mxu0 0.0
    %311 = vmatprep.subr.mxu0 0.0
    %312 = vmatpush1.msra.mxu0 0.0
    %313 = vmatprep.subr.mxu0 0.0
    %314 = vmatpush1.msra.mxu0 0.0
    %315 = vmatprep.subr.mxu0 0.0
    %316 = vmatpush1.msra.mxu0 0.0
    %317 = vmatprep.subr.mxu0 0.0
    %318 = vmatpush1.msra.mxu0 0.0
    %319 = vmatprep.subr.mxu0 0.0
    %320 = vmatpush1.msra.mxu0 0.0
    %321 = vmatprep.subr.mxu0 0.0
    %322 = vmatpush1.msra.mxu0 0.0
    %323 = vmatprep.subr.mxu0 0.0
    %324 = vmatpush1.msra.mxu0 0.0
    %325 = vmatprep.subr.mxu0 0.0
    %326 = vmatpush1.msra.mxu0 0.0
    %327 = vmatprep.subr.mxu0 0.0
    %328 = vmatpush1.msra.mxu0 0.0
    %329 = vmatprep.subr.mxu0 0.0
    %330 = vmatpush1.msra.mxu0 0.0
    %331 = vmatprep.subr.mxu0 0.0
    %332 = vmatpush1.msra.mxu0 0.0
    %333 = vmatprep.subr.mxu0 0.0
    %334 = vmatpush1.msra.mxu0 0.0
    %335 = vmatprep.subr.mxu0 0.0
    %336 = vmatpush1.msra.mxu0 0.0
    %337 = vmatprep.subr.mxu0 0.0
    %338 = vmatpush1.msra.mxu0 0.0
    %339 = vmatprep.subr.mxu0 0.0
    %340 = vmatpush1.msra.mxu0 0.0
    %341 = vmatprep.subr.mxu0 0.0
    %342 = vmatpush1.msra.mxu0 0.0
    %343 = vmatprep.subr.mxu0 0.0
    %344 = vmatpush1.msra.mxu0 0.0
    %345 = vmatprep.subr.mxu0 0.0
    %346 = vmatpush1.msra.mxu0 0.0
    %347 = vmatprep.subr.mxu0 0.0
    %348 = vmatpush1.msra.mxu0 0.0
    %349 = vmatprep.subr.mxu0 0.0
    %350 = vmatpush1.msra.mxu0 0.0
    %351 = vmatprep.subr.mxu0 0.0
    %352 = vmatpush1.msra.mxu0 0.0
    %353 = vmatprep.subr.mxu0 0.0
    %354 = vmatpush1.msra.mxu0 0.0
    %355 = vmatprep.subr.mxu0 0.0
    %356 = vmatpush1.msra.mxu0 0.0
    %357 = vmatprep.subr.mxu0 0.0
    %358 = vmatpush1.msra.mxu0 0.0
    %359 = vmatprep.subr.mxu0 0.0
    %360 = vmatpush1.msra.mxu0 0.0
    %361 = vmatprep.subr.mxu0 0.0
    %362 = vmatpush1.msra.mxu0 0.0
    %363 = vmatprep.subr.mxu0 0.0
    %364 = vmatpush1.msra.mxu0 0.0
    %365 = vmatprep.mubr.f32.mxu0 0.0
    %366 = vmatmul.mubr.f32.gmra.mrb[0].mxu0 %v263
    %v367 = vpop.f32.mrb[0].mxu0
    %v368 = vadd.f32 0.0, %v367
    %v369 = vpop.f32.mrb[0].mxu0
    %v370 = vadd.f32 0.0, %v369
    %371 = vmatprep.mubr.f32.mxu0 0.0
    %372 = vmatmul.mubr.f32.gmra.mrb[0].mxu0 %v266
    %v373 = vpop.f32.mrb[0].mxu0
    %v374 = vadd.f32 0.0, %v373
    %v375 = vpop.f32.mrb[0].mxu0
    %v376 = vadd.f32 0.0, %v375
    %377 = vmatprep.mubr.f32.mxu0 0.0
    %378 = vmatmul.mubr.f32.gmra.mrb[0].mxu0 %v269
    %v379 = vpop.f32.mrb[0].mxu0
    %v380 = vadd.f32 0.0, %v379
    %v381 = vpop.f32.mrb[0].mxu0
    %v382 = vadd.f32 0.0, %v381
    %383 = vmatprep.mubr.f32.mxu0 0.0
    %384 = vmatmul.mubr.f32.gmra.mrb[0].mxu0 %v272
    %v385 = vpop.f32.mrb[0].mxu0
    %v386 = vadd.f32 0.0, %v385
    %v387 = vpop.f32.mrb[0].mxu0
    %v388 = vadd.f32 0.0, %v387
    %389 = vmatprep.mubr.f32.mxu0 0.0
    %390 = vmatmul.mubr.f32.gmra.mrb[0].mxu0 %v275
    %v391 = vpop.f32.mrb[0].mxu0
    %v392 = vadd.f32 0.0, %v391
    %v393 = vpop.f32.mrb[0].mxu0
    %v394 = vadd.f32 0.0, %v393
    %395 = vmatprep.mubr.f32.mxu0 0.0
    %396 = vmatmul.mubr.f32.gmra.mrb[0].mxu0 %v278
    %v397 = vpop.f32.mrb[0].mxu0
    %v398 = vadd.f32 0.0, %v397
    %v399 = vpop.f32.mrb[0].mxu0
    %v400 = vadd.f32 0.0, %v399
    %401 = vmatprep.mubr.f32.mxu0 0.0
    %402 = vmatmul.mubr.f32.gmra.mrb[0].mxu0 %v281
    %v403 = vpop.f32.mrb[0].mxu0
    %v404 = vadd.f32 0.0, %v403
    %v405 = vpop.f32.mrb[0].mxu0
    %v406 = vadd.f32 0.0, %v405
    %407 = vmatprep.mubr.f32.mxu0 0.0
    %408 = vmatmul.mubr.f32.gmra.mrb[0].mxu0 %v284
    %v409 = vpop.f32.mrb[0].mxu0
    %v410 = vadd.f32 0.0, %v409
    %v411 = vpop.f32.mrb[0].mxu0
    %v412 = vadd.f32 0.0, %v411
    %413 = vmatprep.mubr.f32.mxu0 0.0
    %414 = vmatmul.mubr.f32.gmra.mrb[0].mxu0 %v287
    %v415 = vpop.f32.mrb[0].mxu0
    %v416 = vadd.f32 0.0, %v415
    %v417 = vpop.f32.mrb[0].mxu0
    %v418 = vadd.f32 0.0, %v417
    %419 = vmatprep.mubr.f32.mxu0 0.0
    %420 = vmatmul.mubr.f32.gmra.mrb[0].mxu0 %v290
    %v421 = vpop.f32.mrb[0].mxu0
    %v422 = vadd.f32 0.0, %v421
    %v423 = vpop.f32.mrb[0].mxu0
    %v424 = vadd.f32 0.0, %v423
    %425 = vmatprep.mubr.f32.mxu0 0.0
    %426 = vmatmul.mubr.f32.gmra.mrb[0].mxu0 %v293
    %v427 = vpop.f32.mrb[0].mxu0
    %v428 = vadd.f32 0.0, %v427
    %v429 = vpop.f32.mrb[0].mxu0
    %v430 = vadd.f32 0.0, %v429
    %431 = vmatprep.mubr.f32.mxu0 0.0
    %432 = vmatmul.mubr.f32.gmra.mrb[0].mxu0 %v296
    %v433 = vpop.f32.mrb[0].mxu0
    %v434 = vadd.f32 0.0, %v433
    %v435 = vpop.f32.mrb[0].mxu0
    %v436 = vadd.f32 0.0, %v435
    %437 = vmatprep.mubr.f32.mxu0 0.0
    %438 = vmatmul.mubr.f32.gmra.mrb[0].mxu0 %v299
    %v439 = vpop.f32.mrb[0].mxu0
    %v440 = vadd.f32 0.0, %v439
    %v441 = vpop.f32.mrb[0].mxu0
    %v442 = vadd.f32 0.0, %v441
    %443 = vdwg.mxu0
    %v444 = vld [vmem:[%s6] sm:$0xff]
    %v445 = vld [vmem:[%s6 + $0x8] sm:$0xff]
    %v446 = vld [vmem:[%s6 + $0x10] sm:$0xff]
    %s447 = scalar_lea.vmem %s6, 24
    %v448 = vld [vmem:[%s447] sm:$0xff]
    %v449 = vld [vmem:[%s447 + $0x8] sm:$0xff]
    %v450 = vld [vmem:[%s447 + $0x10] sm:$0xff]
    %s451 = scalar_lea.vmem %s6, 48
    %v452 = vld [vmem:[%s451] sm:$0xff]
    %v453 = vld [vmem:[%s451 + $0x8] sm:$0xff]
    %v454 = vld [vmem:[%s451 + $0x10] sm:$0xff]
    %s455 = scalar_lea.vmem %s6, 72
    %v456 = vld [vmem:[%s455] sm:$0xff]
    %v457 = vld [vmem:[%s455 + $0x8] sm:$0xff]
    %v458 = vld [vmem:[%s455 + $0x10] sm:$0xff]
    %472 = vrot.lane.b32.xlu0 %v368, 80
    %v473 = vpop.permute.xlu0 %472
    %474 = vrot.lane.b32.xlu0 %v374, 80
    %v475 = vpop.permute.xlu0 %474
    %476 = vrot.lane.b32.xlu0 %v380, 80
    %v477 = vpop.permute.xlu0 %476
    %478 = vrot.lane.b32.xlu0 %v386, 80
    %v479 = vpop.permute.xlu0 %478
    %480 = vrot.lane.b32.xlu0 %v392, 80
    %v481 = vpop.permute.xlu0 %480
    %482 = vrot.lane.b32.xlu0 %v398, 80
    %v483 = vpop.permute.xlu0 %482
    %484 = vrot.lane.b32.xlu0 %v404, 80
    %v485 = vpop.permute.xlu0 %484
    %486 = vrot.lane.b32.xlu0 %v410, 80
    %v487 = vpop.permute.xlu0 %486
    %488 = vrot.lane.b32.xlu0 %v416, 80
    %v489 = vpop.permute.xlu0 %488
    %490 = vrot.lane.b32.xlu0 %v422, 80
    %v491 = vpop.permute.xlu0 %490
    %492 = vrot.lane.b32.xlu0 %v428, 80
    %v493 = vpop.permute.xlu0 %492
    %494 = vrot.lane.b32.xlu0 %v434, 80
    %v495 = vpop.permute.xlu0 %494
    %496 = vrot.lane.b32.xlu0 %v440, 80
    %v497 = vpop.permute.xlu0 %496
    %vm511 = vcmask 850944
    %v513 = vsel %vm511, %v456, 0
    %v516 = vsel %vm511, %v457, 0
    %v519 = vsel %vm511, %v458, 0
    %521 = vmatprep.subr.mxu0 0.0
    %522 = vmatpush1.msra.mxu0 %v473
    %523 = vmatprep.subr.mxu0 0.0
    %524 = vmatpush1.msra.mxu0 %v475
    %525 = vmatprep.subr.mxu0 0.0
    %526 = vmatpush1.msra.mxu0 %v477
    %527 = vmatprep.subr.mxu0 0.0
    %528 = vmatpush1.msra.mxu0 %v479
    %529 = vmatprep.subr.mxu0 0.0
    %530 = vmatpush1.msra.mxu0 %v481
    %531 = vmatprep.subr.mxu0 0.0
    %532 = vmatpush1.msra.mxu0 %v483
    %533 = vmatprep.subr.mxu0 0.0
    %534 = vmatpush1.msra.mxu0 %v485
    %535 = vmatprep.subr.mxu0 0.0
    %536 = vmatpush1.msra.mxu0 %v487
    %537 = vmatprep.subr.mxu0 0.0
    %538 = vmatpush1.msra.mxu0 %v489
    %539 = vmatprep.subr.mxu0 0.0
    %540 = vmatpush1.msra.mxu0 %v491
    %541 = vmatprep.subr.mxu0 0.0
    %542 = vmatpush1.msra.mxu0 %v493
    %543 = vmatprep.subr.mxu0 0.0
    %544 = vmatpush1.msra.mxu0 %v495
    %545 = vmatprep.subr.mxu0 0.0
    %546 = vmatpush1.msra.mxu0 %v497
    %547 = vmatprep.subr.mxu0 0.0
    %548 = vmatpush1.msra.mxu0 0.0
    %549 = vmatprep.subr.mxu0 0.0
    %550 = vmatpush1.msra.mxu0 0.0
    %551 = vmatprep.subr.mxu0 0.0
    %552 = vmatpush1.msra.mxu0 0.0
    %553 = vmatprep.subr.mxu0 0.0
    %554 = vmatpush1.msra.mxu0 0.0
    %555 = vmatprep.subr.mxu0 0.0
    %556 = vmatpush1.msra.mxu0 0.0
    %557 = vmatprep.subr.mxu0 0.0
    %558 = vmatpush1.msra.mxu0 0.0
    %559 = vmatprep.subr.mxu0 0.0
    %560 = vmatpush1.msra.mxu0 0.0
    %561 = vmatprep.subr.mxu0 0.0
    %562 = vmatpush1.msra.mxu0 0.0
    %563 = vmatprep.subr.mxu0 0.0
    %564 = vmatpush1.msra.mxu0 0.0
    %565 = vmatprep.subr.mxu0 0.0
    %566 = vmatpush1.msra.mxu0 0.0
    %567 = vmatprep.subr.mxu0 0.0
    %568 = vmatpush1.msra.mxu0 0.0
    %569 = vmatprep.subr.mxu0 0.0
    %570 = vmatpush1.msra.mxu0 0.0
    %571 = vmatprep.subr.mxu0 0.0
    %572 = vmatpush1.msra.mxu0 0.0
    %573 = vmatprep.subr.mxu0 0.0
    %574 = vmatpush1.msra.mxu0 0.0
    %575 = vmatprep.subr.mxu0 0.0
    %576 = vmatpush1.msra.mxu0 0.0
    %577 = vmatprep.subr.mxu0 0.0
    %578 = vmatpush1.msra.mxu0 0.0
    %579 = vmatprep.subr.mxu0 0.0
    %580 = vmatpush1.msra.mxu0 0.0
    %581 = vmatprep.subr.mxu0 0.0
    %582 = vmatpush1.msra.mxu0 0.0
    %583 = vmatprep.subr.mxu0 0.0
    %584 = vmatpush1.msra.mxu0 0.0
    %585 = vmatprep.mubr.f32.mxu0 0.0
    %586 = vmatmul.mubr.f32.gmra.mrb[0].mxu0 %v513
    %v587 = vpop.f32.mrb[0].mxu0
    %v588 = vadd.f32 0.0, %v587
    %v589 = vpop.f32.mrb[0].mxu0
    %590 = vmatprep.mubr.f32.mxu0 0.0
    %591 = vmatmul.mubr.f32.gmra.mrb[0].mxu0 %v516
    %v592 = vpop.f32.mrb[0].mxu0
    %v593 = vadd.f32 0.0, %v592
    %v594 = vpop.f32.mrb[0].mxu0
    %595 = vmatprep.mubr.f32.mxu0 0.0
    %596 = vmatmul.mubr.f32.gmra.mrb[0].mxu0 %v519
    %v597 = vpop.f32.mrb[0].mxu0
    %v598 = vadd.f32 0.0, %v597
    %v599 = vpop.f32.mrb[0].mxu0
    %600 = vdwg.mxu0
    %v602 = vsel %vm511, %v444, 0
    %v605 = vsel %vm511, %v445, 0
    %v608 = vsel %vm511, %v446, 0
    %610 = vmatprep.subr.mxu0 0.0
    %611 = vmatpush1.msra.mxu0 %v368
    %612 = vmatprep.subr.mxu0 0.0
    %613 = vmatpush1.msra.mxu0 %v374
    %614 = vmatprep.subr.mxu0 0.0
    %615 = vmatpush1.msra.mxu0 %v380
    %616 = vmatprep.subr.mxu0 0.0
    %617 = vmatpush1.msra.mxu0 %v386
    %618 = vmatprep.subr.mxu0 0.0
    %619 = vmatpush1.msra.mxu0 %v392
    %620 = vmatprep.subr.mxu0 0.0
    %621 = vmatpush1.msra.mxu0 %v398
    %622 = vmatprep.subr.mxu0 0.0
    %623 = vmatpush1.msra.mxu0 %v404
    %624 = vmatprep.subr.mxu0 0.0
    %625 = vmatpush1.msra.mxu0 %v410
    %626 = vmatprep.subr.mxu0 0.0
    %627 = vmatpush1.msra.mxu0 %v416
    %628 = vmatprep.subr.mxu0 0.0
    %629 = vmatpush1.msra.mxu0 %v422
    %630 = vmatprep.subr.mxu0 0.0
    %631 = vmatpush1.msra.mxu0 %v428
    %632 = vmatprep.subr.mxu0 0.0
    %633 = vmatpush1.msra.mxu0 %v434
    %634 = vmatprep.subr.mxu0 0.0
    %635 = vmatpush1.msra.mxu0 %v440
    %636 = vmatprep.subr.mxu0 0.0
    %637 = vmatpush1.msra.mxu0 0.0
    %638 = vmatprep.subr.mxu0 0.0
    %639 = vmatpush1.msra.mxu0 0.0
    %640 = vmatprep.subr.mxu0 0.0
    %641 = vmatpush1.msra.mxu0 0.0
    %642 = vmatprep.subr.mxu0 0.0
    %643 = vmatpush1.msra.mxu0 0.0
    %644 = vmatprep.subr.mxu0 0.0
    %645 = vmatpush1.msra.mxu0 0.0
    %646 = vmatprep.subr.mxu0 0.0
    %647 = vmatpush1.msra.mxu0 0.0
    %648 = vmatprep.subr.mxu0 0.0
    %649 = vmatpush1.msra.mxu0 0.0
    %650 = vmatprep.subr.mxu0 0.0
    %651 = vmatpush1.msra.mxu0 0.0
    %652 = vmatprep.subr.mxu0 0.0
    %653 = vmatpush1.msra.mxu0 0.0
    %654 = vmatprep.subr.mxu0 0.0
    %655 = vmatpush1.msra.mxu0 0.0
    %656 = vmatprep.subr.mxu0 0.0
    %657 = vmatpush1.msra.mxu0 0.0
    %658 = vmatprep.subr.mxu0 0.0
    %659 = vmatpush1.msra.mxu0 0.0
    %660 = vmatprep.subr.mxu0 0.0
    %661 = vmatpush1.msra.mxu0 0.0
    %662 = vmatprep.subr.mxu0 0.0
    %663 = vmatpush1.msra.mxu0 0.0
    %664 = vmatprep.subr.mxu0 0.0
    %665 = vmatpush1.msra.mxu0 0.0
    %666 = vmatprep.subr.mxu0 0.0
    %667 = vmatpush1.msra.mxu0 0.0
    %668 = vmatprep.subr.mxu0 0.0
    %669 = vmatpush1.msra.mxu0 0.0
    %670 = vmatprep.subr.mxu0 0.0
    %671 = vmatpush1.msra.mxu0 0.0
    %672 = vmatprep.subr.mxu0 0.0
    %673 = vmatpush1.msra.mxu0 0.0
    %674 = vmatprep.mubr.f32.mxu0 0.0
    %675 = vmatmul.mubr.f32.gmra.mrb[0].mxu0 %v602
    %v676 = vpop.f32.mrb[0].mxu0
    %v677 = vadd.f32 %v588, %v676
    %v678 = vpop.f32.mrb[0].mxu0
    %679 = vmatprep.mubr.f32.mxu0 0.0
    %680 = vmatmul.mubr.f32.gmra.mrb[0].mxu0 %v605
    %v681 = vpop.f32.mrb[0].mxu0
    %v682 = vadd.f32 %v593, %v681
    %v683 = vpop.f32.mrb[0].mxu0
    %684 = vmatprep.mubr.f32.mxu0 0.0
    %685 = vmatmul.mubr.f32.gmra.mrb[0].mxu0 %v608
    %v686 = vpop.f32.mrb[0].mxu0
    %v687 = vadd.f32 %v598, %v686
    %v688 = vpop.f32.mrb[0].mxu0
    %689 = vdwg.mxu0
    %s690 = scalar_lea.vmem %s6, 96
    %v691 = vld [vmem:[%s690] sm:$0xff]
    %v692 = vld [vmem:[%s690 + $0x8] sm:$0xff]
    %v693 = vld [vmem:[%s690 + $0x10] sm:$0xff]
    %694 = vrot.lane.b32.xlu0 %v368, 64
    %v695 = vpop.permute.xlu0 %694
    %696 = vrot.lane.b32.xlu0 %v374, 64
    %v697 = vpop.permute.xlu0 %696
    %698 = vrot.lane.b32.xlu0 %v380, 64
    %v699 = vpop.permute.xlu0 %698
    %700 = vrot.lane.b32.xlu0 %v386, 64
    %v701 = vpop.permute.xlu0 %700
    %702 = vrot.lane.b32.xlu0 %v392, 64
    %v703 = vpop.permute.xlu0 %702
    %704 = vrot.lane.b32.xlu0 %v398, 64
    %v705 = vpop.permute.xlu0 %704
    %706 = vrot.lane.b32.xlu0 %v404, 64
    %v707 = vpop.permute.xlu0 %706
    %708 = vrot.lane.b32.xlu0 %v410, 64
    %v709 = vpop.permute.xlu0 %708
    %710 = vrot.lane.b32.xlu0 %v416, 64
    %v711 = vpop.permute.xlu0 %710
    %712 = vrot.lane.b32.xlu0 %v422, 64
    %v713 = vpop.permute.xlu0 %712
    %714 = vrot.lane.b32.xlu0 %v428, 64
    %v715 = vpop.permute.xlu0 %714
    %716 = vrot.lane.b32.xlu0 %v434, 64
    %v717 = vpop.permute.xlu0 %716
    %718 = vrot.lane.b32.xlu0 %v440, 64
    %v719 = vpop.permute.xlu0 %718
    %v734 = vsel %vm511, %v691, 0
    %v737 = vsel %vm511, %v692, 0
    %v740 = vsel %vm511, %v693, 0
    %742 = vmatprep.subr.mxu0 0.0
    %743 = vmatpush1.msra.mxu0 %v695
    %744 = vmatprep.subr.mxu0 0.0
    %745 = vmatpush1.msra.mxu0 %v697
    %746 = vmatprep.subr.mxu0 0.0
    %747 = vmatpush1.msra.mxu0 %v699
    %748 = vmatprep.subr.mxu0 0.0
    %749 = vmatpush1.msra.mxu0 %v701
    %750 = vmatprep.subr.mxu0 0.0
    %751 = vmatpush1.msra.mxu0 %v703
    %752 = vmatprep.subr.mxu0 0.0
    %753 = vmatpush1.msra.mxu0 %v705
    %754 = vmatprep.subr.mxu0 0.0
    %755 = vmatpush1.msra.mxu0 %v707
    %756 = vmatprep.subr.mxu0 0.0
    %757 = vmatpush1.msra.mxu0 %v709
    %758 = vmatprep.subr.mxu0 0.0
    %759 = vmatpush1.msra.mxu0 %v711
    %760 = vmatprep.subr.mxu0 0.0
    %761 = vmatpush1.msra.mxu0 %v713
    %762 = vmatprep.subr.mxu0 0.0
    %763 = vmatpush1.msra.mxu0 %v715
    %764 = vmatprep.subr.mxu0 0.0
    %765 = vmatpush1.msra.mxu0 %v717
    %766 = vmatprep.subr.mxu0 0.0
    %767 = vmatpush1.msra.mxu0 %v719
    %768 = vmatprep.subr.mxu0 0.0
    %769 = vmatpush1.msra.mxu0 0.0
    %770 = vmatprep.subr.mxu0 0.0
    %771 = vmatpush1.msra.mxu0 0.0
    %772 = vmatprep.subr.mxu0 0.0
    %773 = vmatpush1.msra.mxu0 0.0
    %774 = vmatprep.subr.mxu0 0.0
    %775 = vmatpush1.msra.mxu0 0.0
    %776 = vmatprep.subr.mxu0 0.0
    %777 = vmatpush1.msra.mxu0 0.0
    %778 = vmatprep.subr.mxu0 0.0
    %779 = vmatpush1.msra.mxu0 0.0
    %780 = vmatprep.subr.mxu0 0.0
    %781 = vmatpush1.msra.mxu0 0.0
    %782 = vmatprep.subr.mxu0 0.0
    %783 = vmatpush1.msra.mxu0 0.0
    %784 = vmatprep.subr.mxu0 0.0
    %785 = vmatpush1.msra.mxu0 0.0
    %786 = vmatprep.subr.mxu0 0.0
    %787 = vmatpush1.msra.mxu0 0.0
    %788 = vmatprep.subr.mxu0 0.0
    %789 = vmatpush1.msra.mxu0 0.0
    %790 = vmatprep.subr.mxu0 0.0
    %791 = vmatpush1.msra.mxu0 0.0
    %792 = vmatprep.subr.mxu0 0.0
    %793 = vmatpush1.msra.mxu0 0.0
    %794 = vmatprep.subr.mxu0 0.0
    %795 = vmatpush1.msra.mxu0 0.0
    %796 = vmatprep.subr.mxu0 0.0
    %797 = vmatpush1.msra.mxu0 0.0
    %798 = vmatprep.subr.mxu0 0.0
    %799 = vmatpush1.msra.mxu0 0.0
    %800 = vmatprep.subr.mxu0 0.0
    %801 = vmatpush1.msra.mxu0 0.0
    %802 = vmatprep.subr.mxu0 0.0
    %803 = vmatpush1.msra.mxu0 0.0
    %804 = vmatprep.subr.mxu0 0.0
    %805 = vmatpush1.msra.mxu0 0.0
    %806 = vmatprep.mubr.f32.mxu0 0.0
    %807 = vmatmul.mubr.f32.gmra.mrb[0].mxu0 %v734
    %v808 = vpop.f32.mrb[0].mxu0
    %v809 = vadd.f32 0.0, %v808
    %v810 = vpop.f32.mrb[0].mxu0
    %811 = vmatprep.mubr.f32.mxu0 0.0
    %812 = vmatmul.mubr.f32.gmra.mrb[0].mxu0 %v737
    %v813 = vpop.f32.mrb[0].mxu0
    %v814 = vadd.f32 0.0, %v813
    %v815 = vpop.f32.mrb[0].mxu0
    %816 = vmatprep.mubr.f32.mxu0 0.0
    %817 = vmatmul.mubr.f32.gmra.mrb[0].mxu0 %v740
    %v818 = vpop.f32.mrb[0].mxu0
    %v819 = vadd.f32 0.0, %v818
    %v820 = vpop.f32.mrb[0].mxu0
    %821 = vdwg.mxu0
    %822 = vrot.lane.b32.xlu0 %v368, 112
    %v823 = vpop.permute.xlu0 %822
    %824 = vrot.lane.b32.xlu0 %v374, 112
    %v825 = vpop.permute.xlu0 %824
    %826 = vrot.lane.b32.xlu0 %v380, 112
    %v827 = vpop.permute.xlu0 %826
    %828 = vrot.lane.b32.xlu0 %v386, 112
    %v829 = vpop.permute.xlu0 %828
    %830 = vrot.lane.b32.xlu0 %v392, 112
    %v831 = vpop.permute.xlu0 %830
    %832 = vrot.lane.b32.xlu0 %v398, 112
    %v833 = vpop.permute.xlu0 %832
    %834 = vrot.lane.b32.xlu0 %v404, 112
    %v835 = vpop.permute.xlu0 %834
    %836 = vrot.lane.b32.xlu0 %v410, 112
    %v837 = vpop.permute.xlu0 %836
    %838 = vrot.lane.b32.xlu0 %v416, 112
    %v839 = vpop.permute.xlu0 %838
    %840 = vrot.lane.b32.xlu0 %v422, 112
    %v841 = vpop.permute.xlu0 %840
    %842 = vrot.lane.b32.xlu0 %v428, 112
    %v843 = vpop.permute.xlu0 %842
    %844 = vrot.lane.b32.xlu0 %v434, 112
    %v845 = vpop.permute.xlu0 %844
    %846 = vrot.lane.b32.xlu0 %v440, 112
    %v847 = vpop.permute.xlu0 %846
    %v862 = vsel %vm511, %v448, 0
    %v865 = vsel %vm511, %v449, 0
    %v868 = vsel %vm511, %v450, 0
    %870 = vmatprep.subr.mxu0 0.0
    %871 = vmatpush1.msra.mxu0 %v823
    %872 = vmatprep.subr.mxu0 0.0
    %873 = vmatpush1.msra.mxu0 %v825
    %874 = vmatprep.subr.mxu0 0.0
    %875 = vmatpush1.msra.mxu0 %v827
    %876 = vmatprep.subr.mxu0 0.0
    %877 = vmatpush1.msra.mxu0 %v829
    %878 = vmatprep.subr.mxu0 0.0
    %879 = vmatpush1.msra.mxu0 %v831
    %880 = vmatprep.subr.mxu0 0.0
    %881 = vmatpush1.msra.mxu0 %v833
    %882 = vmatprep.subr.mxu0 0.0
    %883 = vmatpush1.msra.mxu0 %v835
    %884 = vmatprep.subr.mxu0 0.0
    %885 = vmatpush1.msra.mxu0 %v837
    %886 = vmatprep.subr.mxu0 0.0
    %887 = vmatpush1.msra.mxu0 %v839
    %888 = vmatprep.subr.mxu0 0.0
    %889 = vmatpush1.msra.mxu0 %v841
    %890 = vmatprep.subr.mxu0 0.0
    %891 = vmatpush1.msra.mxu0 %v843
    %892 = vmatprep.subr.mxu0 0.0
    %893 = vmatpush1.msra.mxu0 %v845
    %894 = vmatprep.subr.mxu0 0.0
    %895 = vmatpush1.msra.mxu0 %v847
    %896 = vmatprep.subr.mxu0 0.0
    %897 = vmatpush1.msra.mxu0 0.0
    %898 = vmatprep.subr.mxu0 0.0
    %899 = vmatpush1.msra.mxu0 0.0
    %900 = vmatprep.subr.mxu0 0.0
    %901 = vmatpush1.msra.mxu0 0.0
    %902 = vmatprep.subr.mxu0 0.0
    %903 = vmatpush1.msra.mxu0 0.0
    %904 = vmatprep.subr.mxu0 0.0
    %905 = vmatpush1.msra.mxu0 0.0
    %906 = vmatprep.subr.mxu0 0.0
    %907 = vmatpush1.msra.mxu0 0.0
    %908 = vmatprep.subr.mxu0 0.0
    %909 = vmatpush1.msra.mxu0 0.0
    %910 = vmatprep.subr.mxu0 0.0
    %911 = vmatpush1.msra.mxu0 0.0
    %912 = vmatprep.subr.mxu0 0.0
    %913 = vmatpush1.msra.mxu0 0.0
    %914 = vmatprep.subr.mxu0 0.0
    %915 = vmatpush1.msra.mxu0 0.0
    %916 = vmatprep.subr.mxu0 0.0
    %917 = vmatpush1.msra.mxu0 0.0
    %918 = vmatprep.subr.mxu0 0.0
    %919 = vmatpush1.msra.mxu0 0.0
    %920 = vmatprep.subr.mxu0 0.0
    %921 = vmatpush1.msra.mxu0 0.0
    %922 = vmatprep.subr.mxu0 0.0
    %923 = vmatpush1.msra.mxu0 0.0
    %924 = vmatprep.subr.mxu0 0.0
    %925 = vmatpush1.msra.mxu0 0.0
    %926 = vmatprep.subr.mxu0 0.0
    %927 = vmatpush1.msra.mxu0 0.0
    %928 = vmatprep.subr.mxu0 0.0
    %929 = vmatpush1.msra.mxu0 0.0
    %930 = vmatprep.subr.mxu0 0.0
    %931 = vmatpush1.msra.mxu0 0.0
    %932 = vmatprep.subr.mxu0 0.0
    %933 = vmatpush1.msra.mxu0 0.0
    %934 = vmatprep.mubr.f32.mxu0 0.0
    %935 = vmatmul.mubr.f32.gmra.mrb[0].mxu0 %v862
    %v936 = vpop.f32.mrb[0].mxu0
    %v937 = vadd.f32 %v809, %v936
    %v938 = vpop.f32.mrb[0].mxu0
    %939 = vmatprep.mubr.f32.mxu0 0.0
    %940 = vmatmul.mubr.f32.gmra.mrb[0].mxu0 %v865
    %v941 = vpop.f32.mrb[0].mxu0
    %v942 = vadd.f32 %v814, %v941
    %v943 = vpop.f32.mrb[0].mxu0
    %944 = vmatprep.mubr.f32.mxu0 0.0
    %945 = vmatmul.mubr.f32.gmra.mrb[0].mxu0 %v868
    %v946 = vpop.f32.mrb[0].mxu0
    %v947 = vadd.f32 %v819, %v946
    %v948 = vpop.f32.mrb[0].mxu0
    %949 = vdwg.mxu0
    %s950 = scalar_lea.vmem %s6, 120
    %v951 = vld [vmem:[%s950] sm:$0xff]
    %v952 = vld [vmem:[%s950 + $0x8] sm:$0xff]
    %v953 = vld [vmem:[%s950 + $0x10] sm:$0xff]
    %954 = vrot.lane.b32.xlu0 %v368, 48
    %v955 = vpop.permute.xlu0 %954
    %956 = vrot.lane.b32.xlu0 %v374, 48
    %v957 = vpop.permute.xlu0 %956
    %958 = vrot.lane.b32.xlu0 %v380, 48
    %v959 = vpop.permute.xlu0 %958
    %960 = vrot.lane.b32.xlu0 %v386, 48
    %v961 = vpop.permute.xlu0 %960
    %962 = vrot.lane.b32.xlu0 %v392, 48
    %v963 = vpop.permute.xlu0 %962
    %964 = vrot.lane.b32.xlu0 %v398, 48
    %v965 = vpop.permute.xlu0 %964
    %966 = vrot.lane.b32.xlu0 %v404, 48
    %v967 = vpop.permute.xlu0 %966
    %968 = vrot.lane.b32.xlu0 %v410, 48
    %v969 = vpop.permute.xlu0 %968
    %970 = vrot.lane.b32.xlu0 %v416, 48
    %v971 = vpop.permute.xlu0 %970
    %972 = vrot.lane.b32.xlu0 %v422, 48
    %v973 = vpop.permute.xlu0 %972
    %974 = vrot.lane.b32.xlu0 %v428, 48
    %v975 = vpop.permute.xlu0 %974
    %976 = vrot.lane.b32.xlu0 %v434, 48
    %v977 = vpop.permute.xlu0 %976
    %978 = vrot.lane.b32.xlu0 %v440, 48
    %v979 = vpop.permute.xlu0 %978
    %v994 = vsel %vm511, %v951, 0
    %v997 = vsel %vm511, %v952, 0
    %v1000 = vsel %vm511, %v953, 0
    %1002 = vmatprep.subr.mxu0 0.0
    %1003 = vmatpush1.msra.mxu0 %v955
    %1004 = vmatprep.subr.mxu0 0.0
    %1005 = vmatpush1.msra.mxu0 %v957
    %1006 = vmatprep.subr.mxu0 0.0
    %1007 = vmatpush1.msra.mxu0 %v959
    %1008 = vmatprep.subr.mxu0 0.0
    %1009 = vmatpush1.msra.mxu0 %v961
    %1010 = vmatprep.subr.mxu0 0.0
    %1011 = vmatpush1.msra.mxu0 %v963
    %1012 = vmatprep.subr.mxu0 0.0
    %1013 = vmatpush1.msra.mxu0 %v965
    %1014 = vmatprep.subr.mxu0 0.0
    %1015 = vmatpush1.msra.mxu0 %v967
    %1016 = vmatprep.subr.mxu0 0.0
    %1017 = vmatpush1.msra.mxu0 %v969
    %1018 = vmatprep.subr.mxu0 0.0
    %1019 = vmatpush1.msra.mxu0 %v971
    %1020 = vmatprep.subr.mxu0 0.0
    %1021 = vmatpush1.msra.mxu0 %v973
    %1022 = vmatprep.subr.mxu0 0.0
    %1023 = vmatpush1.msra.mxu0 %v975
    %1024 = vmatprep.subr.mxu0 0.0
    %1025 = vmatpush1.msra.mxu0 %v977
    %1026 = vmatprep.subr.mxu0 0.0
    %1027 = vmatpush1.msra.mxu0 %v979
    %1028 = vmatprep.subr.mxu0 0.0
    %1029 = vmatpush1.msra.mxu0 0.0
    %1030 = vmatprep.subr.mxu0 0.0
    %1031 = vmatpush1.msra.mxu0 0.0
    %1032 = vmatprep.subr.mxu0 0.0
    %1033 = vmatpush1.msra.mxu0 0.0
    %1034 = vmatprep.subr.mxu0 0.0
    %1035 = vmatpush1.msra.mxu0 0.0
    %1036 = vmatprep.subr.mxu0 0.0
    %1037 = vmatpush1.msra.mxu0 0.0
    %1038 = vmatprep.subr.mxu0 0.0
    %1039 = vmatpush1.msra.mxu0 0.0
    %1040 = vmatprep.subr.mxu0 0.0
    %1041 = vmatpush1.msra.mxu0 0.0
    %1042 = vmatprep.subr.mxu0 0.0
    %1043 = vmatpush1.msra.mxu0 0.0
    %1044 = vmatprep.subr.mxu0 0.0
    %1045 = vmatpush1.msra.mxu0 0.0
    %1046 = vmatprep.subr.mxu0 0.0
    %1047 = vmatpush1.msra.mxu0 0.0
    %1048 = vmatprep.subr.mxu0 0.0
    %1049 = vmatpush1.msra.mxu0 0.0
    %1050 = vmatprep.subr.mxu0 0.0
    %1051 = vmatpush1.msra.mxu0 0.0
    %1052 = vmatprep.subr.mxu0 0.0
    %1053 = vmatpush1.msra.mxu0 0.0
    %1054 = vmatprep.subr.mxu0 0.0
    %1055 = vmatpush1.msra.mxu0 0.0
    %1056 = vmatprep.subr.mxu0 0.0
    %1057 = vmatpush1.msra.mxu0 0.0
    %1058 = vmatprep.subr.mxu0 0.0
    %1059 = vmatpush1.msra.mxu0 0.0
    %1060 = vmatprep.subr.mxu0 0.0
    %1061 = vmatpush1.msra.mxu0 0.0
    %1062 = vmatprep.subr.mxu0 0.0
    %1063 = vmatpush1.msra.mxu0 0.0
    %1064 = vmatprep.subr.mxu0 0.0
    %1065 = vmatpush1.msra.mxu0 0.0
    %1066 = vmatprep.mubr.f32.mxu0 0.0
    %1067 = vmatmul.mubr.f32.gmra.mrb[0].mxu0 %v994
    %v1068 = vpop.f32.mrb[0].mxu0
    %v1069 = vadd.f32 0.0, %v1068
    %v1070 = vpop.f32.mrb[0].mxu0
    %1071 = vmatprep.mubr.f32.mxu0 0.0
    %1072 = vmatmul.mubr.f32.gmra.mrb[0].mxu0 %v997
    %v1073 = vpop.f32.mrb[0].mxu0
    %v1074 = vadd.f32 0.0, %v1073
    %v1075 = vpop.f32.mrb[0].mxu0
    %1076 = vmatprep.mubr.f32.mxu0 0.0
    %1077 = vmatmul.mubr.f32.gmra.mrb[0].mxu0 %v1000
    %v1078 = vpop.f32.mrb[0].mxu0
    %v1079 = vadd.f32 0.0, %v1078
    %v1080 = vpop.f32.mrb[0].mxu0
    %1081 = vdwg.mxu0
    %1082 = vrot.lane.b32.xlu0 %v368, 96
    %v1083 = vpop.permute.xlu0 %1082
    %1084 = vrot.lane.b32.xlu0 %v374, 96
    %v1085 = vpop.permute.xlu0 %1084
    %1086 = vrot.lane.b32.xlu0 %v380, 96
    %v1087 = vpop.permute.xlu0 %1086
    %1088 = vrot.lane.b32.xlu0 %v386, 96
    %v1089 = vpop.permute.xlu0 %1088
    %1090 = vrot.lane.b32.xlu0 %v392, 96
    %v1091 = vpop.permute.xlu0 %1090
    %1092 = vrot.lane.b32.xlu0 %v398, 96
    %v1093 = vpop.permute.xlu0 %1092
    %1094 = vrot.lane.b32.xlu0 %v404, 96
    %v1095 = vpop.permute.xlu0 %1094
    %1096 = vrot.lane.b32.xlu0 %v410, 96
    %v1097 = vpop.permute.xlu0 %1096
    %1098 = vrot.lane.b32.xlu0 %v416, 96
    %v1099 = vpop.permute.xlu0 %1098
    %1100 = vrot.lane.b32.xlu0 %v422, 96
    %v1101 = vpop.permute.xlu0 %1100
    %1102 = vrot.lane.b32.xlu0 %v428, 96
    %v1103 = vpop.permute.xlu0 %1102
    %1104 = vrot.lane.b32.xlu0 %v434, 96
    %v1105 = vpop.permute.xlu0 %1104
    %1106 = vrot.lane.b32.xlu0 %v440, 96
    %v1107 = vpop.permute.xlu0 %1106
    %v1122 = vsel %vm511, %v452, 0
    %v1125 = vsel %vm511, %v453, 0
    %v1128 = vsel %vm511, %v454, 0
    %1130 = vmatprep.subr.mxu0 0.0
    %1131 = vmatpush1.msra.mxu0 %v1083
    %1132 = vmatprep.subr.mxu0 0.0
    %1133 = vmatpush1.msra.mxu0 %v1085
    %1134 = vmatprep.subr.mxu0 0.0
    %1135 = vmatpush1.msra.mxu0 %v1087
    %1136 = vmatprep.subr.mxu0 0.0
    %1137 = vmatpush1.msra.mxu0 %v1089
    %1138 = vmatprep.subr.mxu0 0.0
    %1139 = vmatpush1.msra.mxu0 %v1091
    %1140 = vmatprep.subr.mxu0 0.0
    %1141 = vmatpush1.msra.mxu0 %v1093
    %1142 = vmatprep.subr.mxu0 0.0
    %1143 = vmatpush1.msra.mxu0 %v1095
    %1144 = vmatprep.subr.mxu0 0.0
    %1145 = vmatpush1.msra.mxu0 %v1097
    %1146 = vmatprep.subr.mxu0 0.0
    %1147 = vmatpush1.msra.mxu0 %v1099
    %1148 = vmatprep.subr.mxu0 0.0
    %1149 = vmatpush1.msra.mxu0 %v1101
    %1150 = vmatprep.subr.mxu0 0.0
    %1151 = vmatpush1.msra.mxu0 %v1103
    %1152 = vmatprep.subr.mxu0 0.0
    %1153 = vmatpush1.msra.mxu0 %v1105
    %1154 = vmatprep.subr.mxu0 0.0
    %1155 = vmatpush1.msra.mxu0 %v1107
    %1156 = vmatprep.subr.mxu0 0.0
    %1157 = vmatpush1.msra.mxu0 0.0
    %1158 = vmatprep.subr.mxu0 0.0
    %1159 = vmatpush1.msra.mxu0 0.0
    %1160 = vmatprep.subr.mxu0 0.0
    %1161 = vmatpush1.msra.mxu0 0.0
    %1162 = vmatprep.subr.mxu0 0.0
    %1163 = vmatpush1.msra.mxu0 0.0
    %1164 = vmatprep.subr.mxu0 0.0
    %1165 = vmatpush1.msra.mxu0 0.0
    %1166 = vmatprep.subr.mxu0 0.0
    %1167 = vmatpush1.msra.mxu0 0.0
    %1168 = vmatprep.subr.mxu0 0.0
    %1169 = vmatpush1.msra.mxu0 0.0
    %1170 = vmatprep.subr.mxu0 0.0
    %1171 = vmatpush1.msra.mxu0 0.0
    %1172 = vmatprep.subr.mxu0 0.0
    %1173 = vmatpush1.msra.mxu0 0.0
    %1174 = vmatprep.subr.mxu0 0.0
    %1175 = vmatpush1.msra.mxu0 0.0
    %1176 = vmatprep.subr.mxu0 0.0
    %1177 = vmatpush1.msra.mxu0 0.0
    %1178 = vmatprep.subr.mxu0 0.0
    %1179 = vmatpush1.msra.mxu0 0.0
    %1180 = vmatprep.subr.mxu0 0.0
    %1181 = vmatpush1.msra.mxu0 0.0
    %1182 = vmatprep.subr.mxu0 0.0
    %1183 = vmatpush1.msra.mxu0 0.0
    %1184 = vmatprep.subr.mxu0 0.0
    %1185 = vmatpush1.msra.mxu0 0.0
    %1186 = vmatprep.subr.mxu0 0.0
    %1187 = vmatpush1.msra.mxu0 0.0
    %1188 = vmatprep.subr.mxu0 0.0
    %1189 = vmatpush1.msra.mxu0 0.0
    %1190 = vmatprep.subr.mxu0 0.0
    %1191 = vmatpush1.msra.mxu0 0.0
    %1192 = vmatprep.subr.mxu0 0.0
    %1193 = vmatpush1.msra.mxu0 0.0
    %1194 = vmatprep.mubr.f32.mxu0 0.0
    %1195 = vmatmul.mubr.f32.gmra.mrb[0].mxu0 %v1122
    %v1196 = vpop.f32.mrb[0].mxu0
    %v1197 = vadd.f32 %v1069, %v1196
    %v1198 = vpop.f32.mrb[0].mxu0
    %1199 = vmatprep.mubr.f32.mxu0 0.0
    %1200 = vmatmul.mubr.f32.gmra.mrb[0].mxu0 %v1125
    %v1201 = vpop.f32.mrb[0].mxu0
    %v1202 = vadd.f32 %v1074, %v1201
    %v1203 = vpop.f32.mrb[0].mxu0
    %1204 = vmatprep.mubr.f32.mxu0 0.0
    %1205 = vmatmul.mubr.f32.gmra.mrb[0].mxu0 %v1128
    %v1206 = vpop.f32.mrb[0].mxu0
    %v1207 = vadd.f32 %v1079, %v1206
    %v1208 = vpop.f32.mrb[0].mxu0
    %1209 = vdwg.mxu0
    %s1210 = scalar_lea.vmem %s6, 144
    %v1211 = vld [vmem:[%s1210] sm:$0xff]
    %v1212 = vld [vmem:[%s1210 + $0x8] sm:$0xff]
    %v1213 = vld [vmem:[%s1210 + $0x10] sm:$0xff]
    %1214 = vrot.lane.b32.xlu0 %v368, 32
    %v1215 = vpop.permute.xlu0 %1214
    %1216 = vrot.lane.b32.xlu0 %v374, 32
    %v1217 = vpop.permute.xlu0 %1216
    %1218 = vrot.lane.b32.xlu0 %v380, 32
    %v1219 = vpop.permute.xlu0 %1218
    %1220 = vrot.lane.b32.xlu0 %v386, 32
    %v1221 = vpop.permute.xlu0 %1220
    %1222 = vrot.lane.b32.xlu0 %v392, 32
    %v1223 = vpop.permute.xlu0 %1222
    %1224 = vrot.lane.b32.xlu0 %v398, 32
    %v1225 = vpop.permute.xlu0 %1224
    %1226 = vrot.lane.b32.xlu0 %v404, 32
    %v1227 = vpop.permute.xlu0 %1226
    %1228 = vrot.lane.b32.xlu0 %v410, 32
    %v1229 = vpop.permute.xlu0 %1228
    %1230 = vrot.lane.b32.xlu0 %v416, 32
    %v1231 = vpop.permute.xlu0 %1230
    %1232 = vrot.lane.b32.xlu0 %v422, 32
    %v1233 = vpop.permute.xlu0 %1232
    %1234 = vrot.lane.b32.xlu0 %v428, 32
    %v1235 = vpop.permute.xlu0 %1234
    %1236 = vrot.lane.b32.xlu0 %v434, 32
    %v1237 = vpop.permute.xlu0 %1236
    %1238 = vrot.lane.b32.xlu0 %v440, 32
    %v1239 = vpop.permute.xlu0 %1238
    %v1254 = vsel %vm511, %v1211, 0
    %v1257 = vsel %vm511, %v1212, 0
    %v1260 = vsel %vm511, %v1213, 0
    %1262 = vmatprep.subr.mxu0 0.0
    %1263 = vmatpush1.msra.mxu0 %v1215
    %1264 = vmatprep.subr.mxu0 0.0
    %1265 = vmatpush1.msra.mxu0 %v1217
    %1266 = vmatprep.subr.mxu0 0.0
    %1267 = vmatpush1.msra.mxu0 %v1219
    %1268 = vmatprep.subr.mxu0 0.0
    %1269 = vmatpush1.msra.mxu0 %v1221
    %1270 = vmatprep.subr.mxu0 0.0
    %1271 = vmatpush1.msra.mxu0 %v1223
    %1272 = vmatprep.subr.mxu0 0.0
    %1273 = vmatpush1.msra.mxu0 %v1225
    %1274 = vmatprep.subr.mxu0 0.0
    %1275 = vmatpush1.msra.mxu0 %v1227
    %1276 = vmatprep.subr.mxu0 0.0
    %1277 = vmatpush1.msra.mxu0 %v1229
    %1278 = vmatprep.subr.mxu0 0.0
    %1279 = vmatpush1.msra.mxu0 %v1231
    %1280 = vmatprep.subr.mxu0 0.0
    %1281 = vmatpush1.msra.mxu0 %v1233
    %1282 = vmatprep.subr.mxu0 0.0
    %1283 = vmatpush1.msra.mxu0 %v1235
    %1284 = vmatprep.subr.mxu0 0.0
    %1285 = vmatpush1.msra.mxu0 %v1237
    %1286 = vmatprep.subr.mxu0 0.0
    %1287 = vmatpush1.msra.mxu0 %v1239
    %1288 = vmatprep.subr.mxu0 0.0
    %1289 = vmatpush1.msra.mxu0 0.0
    %1290 = vmatprep.subr.mxu0 0.0
    %1291 = vmatpush1.msra.mxu0 0.0
    %1292 = vmatprep.subr.mxu0 0.0
    %1293 = vmatpush1.msra.mxu0 0.0
    %1294 = vmatprep.subr.mxu0 0.0
    %1295 = vmatpush1.msra.mxu0 0.0
    %1296 = vmatprep.subr.mxu0 0.0
    %1297 = vmatpush1.msra.mxu0 0.0
    %1298 = vmatprep.subr.mxu0 0.0
    %1299 = vmatpush1.msra.mxu0 0.0
    %1300 = vmatprep.subr.mxu0 0.0
    %1301 = vmatpush1.msra.mxu0 0.0
    %1302 = vmatprep.subr.mxu0 0.0
    %1303 = vmatpush1.msra.mxu0 0.0
    %1304 = vmatprep.subr.mxu0 0.0
    %1305 = vmatpush1.msra.mxu0 0.0
    %1306 = vmatprep.subr.mxu0 0.0
    %1307 = vmatpush1.msra.mxu0 0.0
    %1308 = vmatprep.subr.mxu0 0.0
    %1309 = vmatpush1.msra.mxu0 0.0
    %1310 = vmatprep.subr.mxu0 0.0
    %1311 = vmatpush1.msra.mxu0 0.0
    %1312 = vmatprep.subr.mxu0 0.0
    %1313 = vmatpush1.msra.mxu0 0.0
    %1314 = vmatprep.subr.mxu0 0.0
    %1315 = vmatpush1.msra.mxu0 0.0
    %1316 = vmatprep.subr.mxu0 0.0
    %1317 = vmatpush1.msra.mxu0 0.0
    %1318 = vmatprep.subr.mxu0 0.0
    %1319 = vmatpush1.msra.mxu0 0.0
    %1320 = vmatprep.subr.mxu0 0.0
    %1321 = vmatpush1.msra.mxu0 0.0
    %1322 = vmatprep.subr.mxu0 0.0
    %1323 = vmatpush1.msra.mxu0 0.0
    %1324 = vmatprep.subr.mxu0 0.0
    %1325 = vmatpush1.msra.mxu0 0.0
    %1326 = vmatprep.mubr.f32.mxu0 0.0
    %1327 = vmatmul.mubr.f32.gmra.mrb[0].mxu0 %v1254
    %v1328 = vpop.f32.mrb[0].mxu0
    %v1329 = vadd.f32 0.0, %v1328
    %v1330 = vpop.f32.mrb[0].mxu0
    %1331 = vmatprep.mubr.f32.mxu0 0.0
    %1332 = vmatmul.mubr.f32.gmra.mrb[0].mxu0 %v1257
    %v1333 = vpop.f32.mrb[0].mxu0
    %v1334 = vadd.f32 0.0, %v1333
    %v1335 = vpop.f32.mrb[0].mxu0
    %1336 = vmatprep.mubr.f32.mxu0 0.0
    %1337 = vmatmul.mubr.f32.gmra.mrb[0].mxu0 %v1260
    %v1338 = vpop.f32.mrb[0].mxu0
    %v1339 = vadd.f32 0.0, %v1338
    %v1340 = vpop.f32.mrb[0].mxu0
    %1341 = vdwg.mxu0
    %v1342 = vadd.f32 %v677, %v1329
    %v1343 = vadd.f32 %v682, %v1334
    %v1344 = vadd.f32 %v687, %v1339
    %s1345 = scalar_lea.vmem %s6, 168
    %v1346 = vld [vmem:[%s1345] sm:$0xff]
    %v1347 = vld [vmem:[%s1345 + $0x8] sm:$0xff]
    %v1348 = vld [vmem:[%s1345 + $0x10] sm:$0xff]
    %1349 = vrot.lane.b32.xlu0 %v368, 16
    %v1350 = vpop.permute.xlu0 %1349
    %1351 = vrot.lane.b32.xlu0 %v374, 16
    %v1352 = vpop.permute.xlu0 %1351
    %1353 = vrot.lane.b32.xlu0 %v380, 16
    %v1354 = vpop.permute.xlu0 %1353
    %1355 = vrot.lane.b32.xlu0 %v386, 16
    %v1356 = vpop.permute.xlu0 %1355
    %1357 = vrot.lane.b32.xlu0 %v392, 16
    %v1358 = vpop.permute.xlu0 %1357
    %1359 = vrot.lane.b32.xlu0 %v398, 16
    %v1360 = vpop.permute.xlu0 %1359
    %1361 = vrot.lane.b32.xlu0 %v404, 16
    %v1362 = vpop.permute.xlu0 %1361
    %1363 = vrot.lane.b32.xlu0 %v410, 16
    %v1364 = vpop.permute.xlu0 %1363
    %1365 = vrot.lane.b32.xlu0 %v416, 16
    %v1366 = vpop.permute.xlu0 %1365
    %1367 = vrot.lane.b32.xlu0 %v422, 16
    %v1368 = vpop.permute.xlu0 %1367
    %1369 = vrot.lane.b32.xlu0 %v428, 16
    %v1370 = vpop.permute.xlu0 %1369
    %1371 = vrot.lane.b32.xlu0 %v434, 16
    %v1372 = vpop.permute.xlu0 %1371
    %1373 = vrot.lane.b32.xlu0 %v440, 16
    %v1374 = vpop.permute.xlu0 %1373
    %v1389 = vsel %vm511, %v1346, 0
    %v1392 = vsel %vm511, %v1347, 0
    %v1395 = vsel %vm511, %v1348, 0
    %1397 = vmatprep.subr.mxu0 0.0
    %1398 = vmatpush1.msra.mxu0 %v1350
    %1399 = vmatprep.subr.mxu0 0.0
    %1400 = vmatpush1.msra.mxu0 %v1352
    %1401 = vmatprep.subr.mxu0 0.0
    %1402 = vmatpush1.msra.mxu0 %v1354
    %1403 = vmatprep.subr.mxu0 0.0
    %1404 = vmatpush1.msra.mxu0 %v1356
    %1405 = vmatprep.subr.mxu0 0.0
    %1406 = vmatpush1.msra.mxu0 %v1358
    %1407 = vmatprep.subr.mxu0 0.0
    %1408 = vmatpush1.msra.mxu0 %v1360
    %1409 = vmatprep.subr.mxu0 0.0
    %1410 = vmatpush1.msra.mxu0 %v1362
    %1411 = vmatprep.subr.mxu0 0.0
    %1412 = vmatpush1.msra.mxu0 %v1364
    %1413 = vmatprep.subr.mxu0 0.0
    %1414 = vmatpush1.msra.mxu0 %v1366
    %1415 = vmatprep.subr.mxu0 0.0
    %1416 = vmatpush1.msra.mxu0 %v1368
    %1417 = vmatprep.subr.mxu0 0.0
    %1418 = vmatpush1.msra.mxu0 %v1370
    %1419 = vmatprep.subr.mxu0 0.0
    %1420 = vmatpush1.msra.mxu0 %v1372
    %1421 = vmatprep.subr.mxu0 0.0
    %1422 = vmatpush1.msra.mxu0 %v1374
    %1423 = vmatprep.subr.mxu0 0.0
    %1424 = vmatpush1.msra.mxu0 0.0
    %1425 = vmatprep.subr.mxu0 0.0
    %1426 = vmatpush1.msra.mxu0 0.0
    %1427 = vmatprep.subr.mxu0 0.0
    %1428 = vmatpush1.msra.mxu0 0.0
    %1429 = vmatprep.subr.mxu0 0.0
    %1430 = vmatpush1.msra.mxu0 0.0
    %1431 = vmatprep.subr.mxu0 0.0
    %1432 = vmatpush1.msra.mxu0 0.0
    %1433 = vmatprep.subr.mxu0 0.0
    %1434 = vmatpush1.msra.mxu0 0.0
    %1435 = vmatprep.subr.mxu0 0.0
    %1436 = vmatpush1.msra.mxu0 0.0
    %1437 = vmatprep.subr.mxu0 0.0
    %1438 = vmatpush1.msra.mxu0 0.0
    %1439 = vmatprep.subr.mxu0 0.0
    %1440 = vmatpush1.msra.mxu0 0.0
    %1441 = vmatprep.subr.mxu0 0.0
    %1442 = vmatpush1.msra.mxu0 0.0
    %1443 = vmatprep.subr.mxu0 0.0
    %1444 = vmatpush1.msra.mxu0 0.0
    %1445 = vmatprep.subr.mxu0 0.0
    %1446 = vmatpush1.msra.mxu0 0.0
    %1447 = vmatprep.subr.mxu0 0.0
    %1448 = vmatpush1.msra.mxu0 0.0
    %1449 = vmatprep.subr.mxu0 0.0
    %1450 = vmatpush1.msra.mxu0 0.0
    %1451 = vmatprep.subr.mxu0 0.0
    %1452 = vmatpush1.msra.mxu0 0.0
    %1453 = vmatprep.subr.mxu0 0.0
    %1454 = vmatpush1.msra.mxu0 0.0
    %1455 = vmatprep.subr.mxu0 0.0
    %1456 = vmatpush1.msra.mxu0 0.0
    %1457 = vmatprep.subr.mxu0 0.0
    %1458 = vmatpush1.msra.mxu0 0.0
    %1459 = vmatprep.subr.mxu0 0.0
    %1460 = vmatpush1.msra.mxu0 0.0
    %1461 = vmatprep.mubr.f32.mxu0 0.0
    %1462 = vmatmul.mubr.f32.gmra.mrb[0].mxu0 %v1389
    %v1463 = vpop.f32.mrb[0].mxu0
    %v1464 = vadd.f32 0.0, %v1463
    %v1465 = vpop.f32.mrb[0].mxu0
    %1466 = vmatprep.mubr.f32.mxu0 0.0
    %1467 = vmatmul.mubr.f32.gmra.mrb[0].mxu0 %v1392
    %v1468 = vpop.f32.mrb[0].mxu0
    %v1469 = vadd.f32 0.0, %v1468
    %v1470 = vpop.f32.mrb[0].mxu0
    %1471 = vmatprep.mubr.f32.mxu0 0.0
    %1472 = vmatmul.mubr.f32.gmra.mrb[0].mxu0 %v1395
    %v1473 = vpop.f32.mrb[0].mxu0
    %v1474 = vadd.f32 0.0, %v1473
    %v1475 = vpop.f32.mrb[0].mxu0
    %1476 = vdwg.mxu0
    %v1477 = vadd.f32 %v937, %v1464
    %v1478 = vadd.f32 %v942, %v1469
    %v1479 = vadd.f32 %v947, %v1474
    %s1480 = scalar_lea.vmem %s6, 192
    %v1481 = vld [vmem:[%s1480] sm:$0xff]
    %v1482 = vld [vmem:[%s1480 + $0x8] sm:$0xff]
    %v1483 = vld [vmem:[%s1480 + $0x10] sm:$0xff]
    %v1485 = vsel %vm511, %v1481, 0
    %v1488 = vsel %vm511, %v1482, 0
    %v1491 = vsel %vm511, %v1483, 0
    %1493 = vmatprep.subr.mxu0 0.0
    %1494 = vmatpush1.msra.mxu0 %v370
    %1495 = vmatprep.subr.mxu0 0.0
    %1496 = vmatpush1.msra.mxu0 %v376
    %1497 = vmatprep.subr.mxu0 0.0
    %1498 = vmatpush1.msra.mxu0 %v382
    %1499 = vmatprep.subr.mxu0 0.0
    %1500 = vmatpush1.msra.mxu0 %v388
    %1501 = vmatprep.subr.mxu0 0.0
    %1502 = vmatpush1.msra.mxu0 %v394
    %1503 = vmatprep.subr.mxu0 0.0
    %1504 = vmatpush1.msra.mxu0 %v400
    %1505 = vmatprep.subr.mxu0 0.0
    %1506 = vmatpush1.msra.mxu0 %v406
    %1507 = vmatprep.subr.mxu0 0.0
    %1508 = vmatpush1.msra.mxu0 %v412
    %1509 = vmatprep.subr.mxu0 0.0
    %1510 = vmatpush1.msra.mxu0 %v418
    %1511 = vmatprep.subr.mxu0 0.0
    %1512 = vmatpush1.msra.mxu0 %v424
    %1513 = vmatprep.subr.mxu0 0.0
    %1514 = vmatpush1.msra.mxu0 %v430
    %1515 = vmatprep.subr.mxu0 0.0
    %1516 = vmatpush1.msra.mxu0 %v436
    %1517 = vmatprep.subr.mxu0 0.0
    %1518 = vmatpush1.msra.mxu0 %v442
    %1519 = vmatprep.subr.mxu0 0.0
    %1520 = vmatpush1.msra.mxu0 0.0
    %1521 = vmatprep.subr.mxu0 0.0
    %1522 = vmatpush1.msra.mxu0 0.0
    %1523 = vmatprep.subr.mxu0 0.0
    %1524 = vmatpush1.msra.mxu0 0.0
    %1525 = vmatprep.subr.mxu0 0.0
    %1526 = vmatpush1.msra.mxu0 0.0
    %1527 = vmatprep.subr.mxu0 0.0
    %1528 = vmatpush1.msra.mxu0 0.0
    %1529 = vmatprep.subr.mxu0 0.0
    %1530 = vmatpush1.msra.mxu0 0.0
    %1531 = vmatprep.subr.mxu0 0.0
    %1532 = vmatpush1.msra.mxu0 0.0
    %1533 = vmatprep.subr.mxu0 0.0
    %1534 = vmatpush1.msra.mxu0 0.0
    %1535 = vmatprep.subr.mxu0 0.0
    %1536 = vmatpush1.msra.mxu0 0.0
    %1537 = vmatprep.subr.mxu0 0.0
    %1538 = vmatpush1.msra.mxu0 0.0
    %1539 = vmatprep.subr.mxu0 0.0
    %1540 = vmatpush1.msra.mxu0 0.0
    %1541 = vmatprep.subr.mxu0 0.0
    %1542 = vmatpush1.msra.mxu0 0.0
    %1543 = vmatprep.subr.mxu0 0.0
    %1544 = vmatpush1.msra.mxu0 0.0
    %1545 = vmatprep.subr.mxu0 0.0
    %1546 = vmatpush1.msra.mxu0 0.0
    %1547 = vmatprep.subr.mxu0 0.0
    %1548 = vmatpush1.msra.mxu0 0.0
    %1549 = vmatprep.subr.mxu0 0.0
    %1550 = vmatpush1.msra.mxu0 0.0
    %1551 = vmatprep.subr.mxu0 0.0
    %1552 = vmatpush1.msra.mxu0 0.0
    %1553 = vmatprep.subr.mxu0 0.0
    %1554 = vmatpush1.msra.mxu0 0.0
    %1555 = vmatprep.subr.mxu0 0.0
    %1556 = vmatpush1.msra.mxu0 0.0
    %1557 = vmatprep.mubr.f32.mxu0 0.0
    %1558 = vmatmul.mubr.f32.gmra.mrb[0].mxu0 %v1485
    %v1559 = vpop.f32.mrb[0].mxu0
    %v1560 = vadd.f32 0.0, %v1559
    %v1561 = vpop.f32.mrb[0].mxu0
    %1562 = vmatprep.mubr.f32.mxu0 0.0
    %1563 = vmatmul.mubr.f32.gmra.mrb[0].mxu0 %v1488
    %v1564 = vpop.f32.mrb[0].mxu0
    %v1565 = vadd.f32 0.0, %v1564
    %v1566 = vpop.f32.mrb[0].mxu0
    %1567 = vmatprep.mubr.f32.mxu0 0.0
    %1568 = vmatmul.mubr.f32.gmra.mrb[0].mxu0 %v1491
    %v1569 = vpop.f32.mrb[0].mxu0
    %v1570 = vadd.f32 0.0, %v1569
    %v1571 = vpop.f32.mrb[0].mxu0
    %1572 = vdwg.mxu0
    %v1573 = vadd.f32 %v1197, %v1560
    %v1574 = vadd.f32 %v1202, %v1565
    %v1575 = vadd.f32 %v1207, %v1570
    %v1576 = vadd.f32 %v1342, %v1477
    %v1577 = vadd.f32 %v1343, %v1478
    %v1578 = vadd.f32 %v1344, %v1479
    %v1579 = vadd.f32 %v1576, %v1573
    %v1580 = vadd.f32 %v1577, %v1574
    %v1581 = vadd.f32 %v1578, %v1575
    %v1582 = vld [vmem:[%s5] sm:$0x1]
    %v1584 = vlaneseq
    %v1585 = vshrl.u32 %v1584, 7
    %v1586 = vsub.s32 0, %v1585
    %v1587 = vrot.slane %v1582, %v1586
    %v1589 = vadd.f32 %v1579, %v1587
    %v1590 = vadd.f32 %v1580, %v1587
    %v1591 = vadd.f32 %v1581, %v1587
    %v1592 = vmax.f32 %v1589, 0.0
    %v1593 = vmax.f32 %v1590, 0.0
    %v1594 = vmax.f32 %v1591, 0.0
    %v1595 = vld [vmem:[%s1] sm:$0x3]
    %v1596 = vld [vmem:[%s7] sm:$0x3f]
    %v1597 = vld [vmem:[%s8] sm:$0x1]
    %v1599 = vlaneseq
    %v1600 = vshrl.u32 %v1599, 7
    %v1601 = vsub.s32 0, %v1600
    %v1602 = vrot.slane %v1597, %v1601
    %vm1604 = vcmask 48128
    %v1606 = vsel %vm1604, %v1595, 0
    %vm1608 = vcmask 1045504
    %v1610 = vsel %vm1608, %v1596, 0
    %1612 = vmatprep.subr.mxu0 0.0
    %1613 = vmatpush1.msra.mxu0 %v1610
    %1614 = vmatprep.subr.mxu0 0.0
    %1615 = vmatpush1.msra.mxu0 0.0
    %1616 = vmatprep.subr.mxu0 0.0
    %1617 = vmatpush1.msra.mxu0 0.0
    %1618 = vmatprep.subr.mxu0 0.0
    %1619 = vmatpush1.msra.mxu0 0.0
    %1620 = vmatprep.subr.mxu0 0.0
    %1621 = vmatpush1.msra.mxu0 0.0
    %1622 = vmatprep.subr.mxu0 0.0
    %1623 = vmatpush1.msra.mxu0 0.0
    %1624 = vmatprep.subr.mxu0 0.0
    %1625 = vmatpush1.msra.mxu0 0.0
    %1626 = vmatprep.subr.mxu0 0.0
    %1627 = vmatpush1.msra.mxu0 0.0
    %1628 = vmatprep.subr.mxu0 0.0
    %1629 = vmatpush1.msra.mxu0 0.0
    %1630 = vmatprep.subr.mxu0 0.0
    %1631 = vmatpush1.msra.mxu0 0.0
    %1632 = vmatprep.subr.mxu0 0.0
    %1633 = vmatpush1.msra.mxu0 0.0
    %1634 = vmatprep.subr.mxu0 0.0
    %1635 = vmatpush1.msra.mxu0 0.0
    %1636 = vmatprep.subr.mxu0 0.0
    %1637 = vmatpush1.msra.mxu0 0.0
    %1638 = vmatprep.subr.mxu0 0.0
    %1639 = vmatpush1.msra.mxu0 0.0
    %1640 = vmatprep.subr.mxu0 0.0
    %1641 = vmatpush1.msra.mxu0 0.0
    %1642 = vmatprep.subr.mxu0 0.0
    %1643 = vmatpush1.msra.mxu0 0.0
    %1644 = vmatprep.subr.mxu0 0.0
    %1645 = vmatpush1.msra.mxu0 0.0
    %1646 = vmatprep.subr.mxu0 0.0
    %1647 = vmatpush1.msra.mxu0 0.0
    %1648 = vmatprep.subr.mxu0 0.0
    %1649 = vmatpush1.msra.mxu0 0.0
    %1650 = vmatprep.subr.mxu0 0.0
    %1651 = vmatpush1.msra.mxu0 0.0
    %1652 = vmatprep.subr.mxu0 0.0
    %1653 = vmatpush1.msra.mxu0 0.0
    %1654 = vmatprep.subr.mxu0 0.0
    %1655 = vmatpush1.msra.mxu0 0.0
    %1656 = vmatprep.subr.mxu0 0.0
    %1657 = vmatpush1.msra.mxu0 0.0
    %1658 = vmatprep.subr.mxu0 0.0
    %1659 = vmatpush1.msra.mxu0 0.0
    %1660 = vmatprep.subr.mxu0 0.0
    %1661 = vmatpush1.msra.mxu0 0.0
    %1662 = vmatprep.subr.mxu0 0.0
    %1663 = vmatpush1.msra.mxu0 0.0
    %1664 = vmatprep.subr.mxu0 0.0
    %1665 = vmatpush1.msra.mxu0 0.0
    %1666 = vmatprep.subr.mxu0 0.0
    %1667 = vmatpush1.msra.mxu0 0.0
    %1668 = vmatprep.subr.mxu0 0.0
    %1669 = vmatpush1.msra.mxu0 0.0
    %1670 = vmatprep.subr.mxu0 0.0
    %1671 = vmatpush1.msra.mxu0 0.0
    %1672 = vmatprep.subr.mxu0 0.0
    %1673 = vmatpush1.msra.mxu0 0.0
    %1674 = vmatprep.subr.mxu0 0.0
    %1675 = vmatpush1.msra.mxu0 0.0
    %1676 = vmatprep.mubr.f32.mxu0 0.0
    %1677 = vmatmul.mubr.f32.gmra.mrb[0].mxu0 %v1606
    %v1678 = vpop.f32.mrb[0].mxu0
    %v1679 = vadd.f32 %v1602, %v1678
    %v1680 = vpop.f32.mrb[0].mxu0
    %1681 = vdwg.mxu0
    %v1682 = vmax.f32 %v1679, 0.0
    %v1683 = vld [vmem:[%s9] sm:$0xff]
    %v1684 = vld [vmem:[%s9 + $0x8] sm:$0xff]
    %v1685 = vld [vmem:[%s11] sm:$0x1]
    %v1687 = vlaneseq
    %v1688 = vshrl.u32 %v1687, 7
    %v1689 = vsub.s32 0, %v1688
    %v1690 = vrot.slane %v1685, %v1689
    %vm1692 = vcmask 130048
    %v1694 = vsel %vm1692, %v1682, 0
    %1696 = vmatprep.subr.mxu0 0.0
    %1697 = vmatpush1.msra.mxu0 %v1683
    %1698 = vmatprep.subr.mxu0 0.0
    %1699 = vmatpush1.msra.mxu0 %v1684
    %1700 = vmatprep.subr.mxu0 0.0
    %1701 = vmatpush1.msra.mxu0 0.0
    %1702 = vmatprep.subr.mxu0 0.0
    %1703 = vmatpush1.msra.mxu0 0.0
    %1704 = vmatprep.subr.mxu0 0.0
    %1705 = vmatpush1.msra.mxu0 0.0
    %1706 = vmatprep.subr.mxu0 0.0
    %1707 = vmatpush1.msra.mxu0 0.0
    %1708 = vmatprep.subr.mxu0 0.0
    %1709 = vmatpush1.msra.mxu0 0.0
    %1710 = vmatprep.subr.mxu0 0.0
    %1711 = vmatpush1.msra.mxu0 0.0
    %1712 = vmatprep.subr.mxu0 0.0
    %1713 = vmatpush1.msra.mxu0 0.0
    %1714 = vmatprep.subr.mxu0 0.0
    %1715 = vmatpush1.msra.mxu0 0.0
    %1716 = vmatprep.subr.mxu0 0.0
    %1717 = vmatpush1.msra.mxu0 0.0
    %1718 = vmatprep.subr.mxu0 0.0
    %1719 = vmatpush1.msra.mxu0 0.0
    %1720 = vmatprep.subr.mxu0 0.0
    %1721 = vmatpush1.msra.mxu0 0.0
    %1722 = vmatprep.subr.mxu0 0.0
    %1723 = vmatpush1.msra.mxu0 0.0
    %1724 = vmatprep.subr.mxu0 0.0
    %1725 = vmatpush1.msra.mxu0 0.0
    %1726 = vmatprep.subr.mxu0 0.0
    %1727 = vmatpush1.msra.mxu0 0.0
    %1728 = vmatprep.subr.mxu0 0.0
    %1729 = vmatpush1.msra.mxu0 0.0
    %1730 = vmatprep.subr.mxu0 0.0
    %1731 = vmatpush1.msra.mxu0 0.0
    %1732 = vmatprep.subr.mxu0 0.0
    %1733 = vmatpush1.msra.mxu0 0.0
    %1734 = vmatprep.subr.mxu0 0.0
    %1735 = vmatpush1.msra.mxu0 0.0
    %1736 = vmatprep.subr.mxu0 0.0
    %1737 = vmatpush1.msra.mxu0 0.0
    %1738 = vmatprep.subr.mxu0 0.0
    %1739 = vmatpush1.msra.mxu0 0.0
    %1740 = vmatprep.subr.mxu0 0.0
    %1741 = vmatpush1.msra.mxu0 0.0
    %1742 = vmatprep.subr.mxu0 0.0
    %1743 = vmatpush1.msra.mxu0 0.0
    %1744 = vmatprep.subr.mxu0 0.0
    %1745 = vmatpush1.msra.mxu0 0.0
    %1746 = vmatprep.subr.mxu0 0.0
    %1747 = vmatpush1.msra.mxu0 0.0
    %1748 = vmatprep.subr.mxu0 0.0
    %1749 = vmatpush1.msra.mxu0 0.0
    %1750 = vmatprep.subr.mxu0 0.0
    %1751 = vmatpush1.msra.mxu0 0.0
    %1752 = vmatprep.subr.mxu0 0.0
    %1753 = vmatpush1.msra.mxu0 0.0
    %1754 = vmatprep.subr.mxu0 0.0
    %1755 = vmatpush1.msra.mxu0 0.0
    %1756 = vmatprep.subr.mxu0 0.0
    %1757 = vmatpush1.msra.mxu0 0.0
    %1758 = vmatprep.subr.mxu0 0.0
    %1759 = vmatpush1.msra.mxu0 0.0
    %1760 = vmatprep.mubr.f32.mxu0 0.0
    %1761 = vmatmul.mubr.f32.gmra.mrb[0].mxu0 %v1694
    %v1762 = vpop.f32.mrb[0].mxu0
    %v1763 = vadd.f32 %v1690, %v1762
    %v1764 = vpop.f32.mrb[0].mxu0
    %1765 = vdwg.mxu0
    %v1766 = vld [vmem:[%s10] sm:$0xff]
    %v1767 = vld [vmem:[%s10 + $0x8] sm:$0xff]
    %v1769 = vsel %vm1692, %v1592, 0
    %1771 = vmatprep.subr.mxu0 0.0
    %1772 = vmatpush1.msra.mxu0 %v1766
    %1773 = vmatprep.subr.mxu0 0.0
    %1774 = vmatpush1.msra.mxu0 %v1767
    %1775 = vmatprep.subr.mxu0 0.0
    %1776 = vmatpush1.msra.mxu0 0.0
    %1777 = vmatprep.subr.mxu0 0.0
    %1778 = vmatpush1.msra.mxu0 0.0
    %1779 = vmatprep.subr.mxu0 0.0
    %1780 = vmatpush1.msra.mxu0 0.0
    %1781 = vmatprep.subr.mxu0 0.0
    %1782 = vmatpush1.msra.mxu0 0.0
    %1783 = vmatprep.subr.mxu0 0.0
    %1784 = vmatpush1.msra.mxu0 0.0
    %1785 = vmatprep.subr.mxu0 0.0
    %1786 = vmatpush1.msra.mxu0 0.0
    %1787 = vmatprep.subr.mxu0 0.0
    %1788 = vmatpush1.msra.mxu0 0.0
    %1789 = vmatprep.subr.mxu0 0.0
    %1790 = vmatpush1.msra.mxu0 0.0
    %1791 = vmatprep.subr.mxu0 0.0
    %1792 = vmatpush1.msra.mxu0 0.0
    %1793 = vmatprep.subr.mxu0 0.0
    %1794 = vmatpush1.msra.mxu0 0.0
    %1795 = vmatprep.subr.mxu0 0.0
    %1796 = vmatpush1.msra.mxu0 0.0
    %1797 = vmatprep.subr.mxu0 0.0
    %1798 = vmatpush1.msra.mxu0 0.0
    %1799 = vmatprep.subr.mxu0 0.0
    %1800 = vmatpush1.msra.mxu0 0.0
    %1801 = vmatprep.subr.mxu0 0.0
    %1802 = vmatpush1.msra.mxu0 0.0
    %1803 = vmatprep.subr.mxu0 0.0
    %1804 = vmatpush1.msra.mxu0 0.0
    %1805 = vmatprep.subr.mxu0 0.0
    %1806 = vmatpush1.msra.mxu0 0.0
    %1807 = vmatprep.subr.mxu0 0.0
    %1808 = vmatpush1.msra.mxu0 0.0
    %1809 = vmatprep.subr.mxu0 0.0
    %1810 = vmatpush1.msra.mxu0 0.0
    %1811 = vmatprep.subr.mxu0 0.0
    %1812 = vmatpush1.msra.mxu0 0.0
    %1813 = vmatprep.subr.mxu0 0.0
    %1814 = vmatpush1.msra.mxu0 0.0
    %1815 = vmatprep.subr.mxu0 0.0
    %1816 = vmatpush1.msra.mxu0 0.0
    %1817 = vmatprep.subr.mxu0 0.0
    %1818 = vmatpush1.msra.mxu0 0.0
    %1819 = vmatprep.subr.mxu0 0.0
    %1820 = vmatpush1.msra.mxu0 0.0
    %1821 = vmatprep.subr.mxu0 0.0
    %1822 = vmatpush1.msra.mxu0 0.0
    %1823 = vmatprep.subr.mxu0 0.0
    %1824 = vmatpush1.msra.mxu0 0.0
    %1825 = vmatprep.subr.mxu0 0.0
    %1826 = vmatpush1.msra.mxu0 0.0
    %1827 = vmatprep.subr.mxu0 0.0
    %1828 = vmatpush1.msra.mxu0 0.0
    %1829 = vmatprep.subr.mxu0 0.0
    %1830 = vmatpush1.msra.mxu0 0.0
    %1831 = vmatprep.subr.mxu0 0.0
    %1832 = vmatpush1.msra.mxu0 0.0
    %1833 = vmatprep.subr.mxu0 0.0
    %1834 = vmatpush1.msra.mxu0 0.0
    %1835 = vmatprep.mubr.f32.mxu0 0.0
    %1836 = vmatmul.mubr.f32.gmra.mrb[0].mxu0 %v1769
    %v1837 = vpop.f32.mrb[0].mxu0
    %v1838 = vadd.f32 0.0, %v1837
    %v1839 = vpop.f32.mrb[0].mxu0
    %1840 = vdwg.mxu0
    %v1841 = vadd.f32 %v1763, %v1838
    %s1842 = scalar_lea.vmem %s10, 16
    %v1843 = vld [vmem:[%s1842] sm:$0xff]
    %v1844 = vld [vmem:[%s1842 + $0x8] sm:$0xff]
    %s1845 = scalar_lea.vmem %s10, 32
    %v1846 = vld [vmem:[%s1845] sm:$0xff]
    %v1847 = vld [vmem:[%s1845 + $0x8] sm:$0xff]
    %s1848 = scalar_lea.vmem %s10, 48
    %v1849 = vld [vmem:[%s1848] sm:$0xff]
    %v1850 = vld [vmem:[%s1848 + $0x8] sm:$0xff]
    %v1851 = vrot.slane %v1592, 6
    %v1852 = vsel %vm1692, %v1851, 0
    %1854 = vmatprep.subr.mxu0 0.0
    %1855 = vmatpush1.msra.mxu0 %v1849
    %1856 = vmatprep.subr.mxu0 0.0
    %1857 = vmatpush1.msra.mxu0 %v1850
    %1858 = vmatprep.subr.mxu0 0.0
    %1859 = vmatpush1.msra.mxu0 0.0
    %1860 = vmatprep.subr.mxu0 0.0
    %1861 = vmatpush1.msra.mxu0 0.0
    %1862 = vmatprep.subr.mxu0 0.0
    %1863 = vmatpush1.msra.mxu0 0.0
    %1864 = vmatprep.subr.mxu0 0.0
    %1865 = vmatpush1.msra.mxu0 0.0
    %1866 = vmatprep.subr.mxu0 0.0
    %1867 = vmatpush1.msra.mxu0 0.0
    %1868 = vmatprep.subr.mxu0 0.0
    %1869 = vmatpush1.msra.mxu0 0.0
    %1870 = vmatprep.subr.mxu0 0.0
    %1871 = vmatpush1.msra.mxu0 0.0
    %1872 = vmatprep.subr.mxu0 0.0
    %1873 = vmatpush1.msra.mxu0 0.0
    %1874 = vmatprep.subr.mxu0 0.0
    %1875 = vmatpush1.msra.mxu0 0.0
    %1876 = vmatprep.subr.mxu0 0.0
    %1877 = vmatpush1.msra.mxu0 0.0
    %1878 = vmatprep.subr.mxu0 0.0
    %1879 = vmatpush1.msra.mxu0 0.0
    %1880 = vmatprep.subr.mxu0 0.0
    %1881 = vmatpush1.msra.mxu0 0.0
    %1882 = vmatprep.subr.mxu0 0.0
    %1883 = vmatpush1.msra.mxu0 0.0
    %1884 = vmatprep.subr.mxu0 0.0
    %1885 = vmatpush1.msra.mxu0 0.0
    %1886 = vmatprep.subr.mxu0 0.0
    %1887 = vmatpush1.msra.mxu0 0.0
    %1888 = vmatprep.subr.mxu0 0.0
    %1889 = vmatpush1.msra.mxu0 0.0
    %1890 = vmatprep.subr.mxu0 0.0
    %1891 = vmatpush1.msra.mxu0 0.0
    %1892 = vmatprep.subr.mxu0 0.0
    %1893 = vmatpush1.msra.mxu0 0.0
    %1894 = vmatprep.subr.mxu0 0.0
    %1895 = vmatpush1.msra.mxu0 0.0
    %1896 = vmatprep.subr.mxu0 0.0
    %1897 = vmatpush1.msra.mxu0 0.0
    %1898 = vmatprep.subr.mxu0 0.0
    %1899 = vmatpush1.msra.mxu0 0.0
    %1900 = vmatprep.subr.mxu0 0.0
    %1901 = vmatpush1.msra.mxu0 0.0
    %1902 = vmatprep.subr.mxu0 0.0
    %1903 = vmatpush1.msra.mxu0 0.0
    %1904 = vmatprep.subr.mxu0 0.0
    %1905 = vmatpush1.msra.mxu0 0.0
    %1906 = vmatprep.subr.mxu0 0.0
    %1907 = vmatpush1.msra.mxu0 0.0
    %1908 = vmatprep.subr.mxu0 0.0
    %1909 = vmatpush1.msra.mxu0 0.0
    %1910 = vmatprep.subr.mxu0 0.0
    %1911 = vmatpush1.msra.mxu0 0.0
    %1912 = vmatprep.subr.mxu0 0.0
    %1913 = vmatpush1.msra.mxu0 0.0
    %1914 = vmatprep.subr.mxu0 0.0
    %1915 = vmatpush1.msra.mxu0 0.0
    %1916 = vmatprep.subr.mxu0 0.0
    %1917 = vmatpush1.msra.mxu0 0.0
    %1918 = vmatprep.mubr.f32.mxu0 0.0
    %1919 = vmatmul.mubr.f32.gmra.mrb[0].mxu0 %v1852
    %v1920 = vpop.f32.mrb[0].mxu0
    %v1921 = vadd.f32 0.0, %v1920
    %v1922 = vpop.f32.mrb[0].mxu0
    %1923 = vdwg.mxu0
    %v1924 = vadd.f32 %v1841, %v1921
    %s1925 = scalar_lea.vmem %s10, 64
    %v1926 = vld [vmem:[%s1925] sm:$0xff]
    %v1927 = vld [vmem:[%s1925 + $0x8] sm:$0xff]
    %v1929 = vsel %vm1692, %v1593, 0
    %1931 = vmatprep.subr.mxu0 0.0
    %1932 = vmatpush1.msra.mxu0 %v1926
    %1933 = vmatprep.subr.mxu0 0.0
    %1934 = vmatpush1.msra.mxu0 %v1927
    %1935 = vmatprep.subr.mxu0 0.0
    %1936 = vmatpush1.msra.mxu0 0.0
    %1937 = vmatprep.subr.mxu0 0.0
    %1938 = vmatpush1.msra.mxu0 0.0
    %1939 = vmatprep.subr.mxu0 0.0
    %1940 = vmatpush1.msra.mxu0 0.0
    %1941 = vmatprep.subr.mxu0 0.0
    %1942 = vmatpush1.msra.mxu0 0.0
    %1943 = vmatprep.subr.mxu0 0.0
    %1944 = vmatpush1.msra.mxu0 0.0
    %1945 = vmatprep.subr.mxu0 0.0
    %1946 = vmatpush1.msra.mxu0 0.0
    %1947 = vmatprep.subr.mxu0 0.0
    %1948 = vmatpush1.msra.mxu0 0.0
    %1949 = vmatprep.subr.mxu0 0.0
    %1950 = vmatpush1.msra.mxu0 0.0
    %1951 = vmatprep.subr.mxu0 0.0
    %1952 = vmatpush1.msra.mxu0 0.0
    %1953 = vmatprep.subr.mxu0 0.0
    %1954 = vmatpush1.msra.mxu0 0.0
    %1955 = vmatprep.subr.mxu0 0.0
    %1956 = vmatpush1.msra.mxu0 0.0
    %1957 = vmatprep.subr.mxu0 0.0
    %1958 = vmatpush1.msra.mxu0 0.0
    %1959 = vmatprep.subr.mxu0 0.0
    %1960 = vmatpush1.msra.mxu0 0.0
    %1961 = vmatprep.subr.mxu0 0.0
    %1962 = vmatpush1.msra.mxu0 0.0
    %1963 = vmatprep.subr.mxu0 0.0
    %1964 = vmatpush1.msra.mxu0 0.0
    %1965 = vmatprep.subr.mxu0 0.0
    %1966 = vmatpush1.msra.mxu0 0.0
    %1967 = vmatprep.subr.mxu0 0.0
    %1968 = vmatpush1.msra.mxu0 0.0
    %1969 = vmatprep.subr.mxu0 0.0
    %1970 = vmatpush1.msra.mxu0 0.0
    %1971 = vmatprep.subr.mxu0 0.0
    %1972 = vmatpush1.msra.mxu0 0.0
    %1973 = vmatprep.subr.mxu0 0.0
    %1974 = vmatpush1.msra.mxu0 0.0
    %1975 = vmatprep.subr.mxu0 0.0
    %1976 = vmatpush1.msra.mxu0 0.0
    %1977 = vmatprep.subr.mxu0 0.0
    %1978 = vmatpush1.msra.mxu0 0.0
    %1979 = vmatprep.subr.mxu0 0.0
    %1980 = vmatpush1.msra.mxu0 0.0
    %1981 = vmatprep.subr.mxu0 0.0
    %1982 = vmatpush1.msra.mxu0 0.0
    %1983 = vmatprep.subr.mxu0 0.0
    %1984 = vmatpush1.msra.mxu0 0.0
    %1985 = vmatprep.subr.mxu0 0.0
    %1986 = vmatpush1.msra.mxu0 0.0
    %1987 = vmatprep.subr.mxu0 0.0
    %1988 = vmatpush1.msra.mxu0 0.0
    %1989 = vmatprep.subr.mxu0 0.0
    %1990 = vmatpush1.msra.mxu0 0.0
    %1991 = vmatprep.subr.mxu0 0.0
    %1992 = vmatpush1.msra.mxu0 0.0
    %1993 = vmatprep.subr.mxu0 0.0
    %1994 = vmatpush1.msra.mxu0 0.0
    %1995 = vmatprep.mubr.f32.mxu0 0.0
    %1996 = vmatmul.mubr.f32.gmra.mrb[0].mxu0 %v1929
    %v1997 = vpop.f32.mrb[0].mxu0
    %v1998 = vadd.f32 0.0, %v1997
    %v1999 = vpop.f32.mrb[0].mxu0
    %2000 = vdwg.mxu0
    %v2001 = vrot.slane %v1592, 2
    %v2002 = vsel %vm1692, %v2001, 0
    %2004 = vmatprep.subr.mxu0 0.0
    %2005 = vmatpush1.msra.mxu0 %v1843
    %2006 = vmatprep.subr.mxu0 0.0
    %2007 = vmatpush1.msra.mxu0 %v1844
    %2008 = vmatprep.subr.mxu0 0.0
    %2009 = vmatpush1.msra.mxu0 0.0
    %2010 = vmatprep.subr.mxu0 0.0
    %2011 = vmatpush1.msra.mxu0 0.0
    %2012 = vmatprep.subr.mxu0 0.0
    %2013 = vmatpush1.msra.mxu0 0.0
    %2014 = vmatprep.subr.mxu0 0.0
    %2015 = vmatpush1.msra.mxu0 0.0
    %2016 = vmatprep.subr.mxu0 0.0
    %2017 = vmatpush1.msra.mxu0 0.0
    %2018 = vmatprep.subr.mxu0 0.0
    %2019 = vmatpush1.msra.mxu0 0.0
    %2020 = vmatprep.subr.mxu0 0.0
    %2021 = vmatpush1.msra.mxu0 0.0
    %2022 = vmatprep.subr.mxu0 0.0
    %2023 = vmatpush1.msra.mxu0 0.0
    %2024 = vmatprep.subr.mxu0 0.0
    %2025 = vmatpush1.msra.mxu0 0.0
    %2026 = vmatprep.subr.mxu0 0.0
    %2027 = vmatpush1.msra.mxu0 0.0
    %2028 = vmatprep.subr.mxu0 0.0
    %2029 = vmatpush1.msra.mxu0 0.0
    %2030 = vmatprep.subr.mxu0 0.0
    %2031 = vmatpush1.msra.mxu0 0.0
    %2032 = vmatprep.subr.mxu0 0.0
    %2033 = vmatpush1.msra.mxu0 0.0
    %2034 = vmatprep.subr.mxu0 0.0
    %2035 = vmatpush1.msra.mxu0 0.0
    %2036 = vmatprep.subr.mxu0 0.0
    %2037 = vmatpush1.msra.mxu0 0.0
    %2038 = vmatprep.subr.mxu0 0.0
    %2039 = vmatpush1.msra.mxu0 0.0
    %2040 = vmatprep.subr.mxu0 0.0
    %2041 = vmatpush1.msra.mxu0 0.0
    %2042 = vmatprep.subr.mxu0 0.0
    %2043 = vmatpush1.msra.mxu0 0.0
    %2044 = vmatprep.subr.mxu0 0.0
    %2045 = vmatpush1.msra.mxu0 0.0
    %2046 = vmatprep.subr.mxu0 0.0
    %2047 = vmatpush1.msra.mxu0 0.0
    %2048 = vmatprep.subr.mxu0 0.0
    %2049 = vmatpush1.msra.mxu0 0.0
    %2050 = vmatprep.subr.mxu0 0.0
    %2051 = vmatpush1.msra.mxu0 0.0
    %2052 = vmatprep.subr.mxu0 0.0
    %2053 = vmatpush1.msra.mxu0 0.0
    %2054 = vmatprep.subr.mxu0 0.0
    %2055 = vmatpush1.msra.mxu0 0.0
    %2056 = vmatprep.subr.mxu0 0.0
    %2057 = vmatpush1.msra.mxu0 0.0
    %2058 = vmatprep.subr.mxu0 0.0
    %2059 = vmatpush1.msra.mxu0 0.0
    %2060 = vmatprep.subr.mxu0 0.0
    %2061 = vmatpush1.msra.mxu0 0.0
    %2062 = vmatprep.subr.mxu0 0.0
    %2063 = vmatpush1.msra.mxu0 0.0
    %2064 = vmatprep.subr.mxu0 0.0
    %2065 = vmatpush1.msra.mxu0 0.0
    %2066 = vmatprep.subr.mxu0 0.0
    %2067 = vmatpush1.msra.mxu0 0.0
    %2068 = vmatprep.mubr.f32.mxu0 0.0
    %2069 = vmatmul.mubr.f32.gmra.mrb[0].mxu0 %v2002
    %v2070 = vpop.f32.mrb[0].mxu0
    %v2071 = vadd.f32 %v1998, %v2070
    %v2072 = vpop.f32.mrb[0].mxu0
    %2073 = vdwg.mxu0
    %s2074 = scalar_lea.vmem %s10, 80
    %v2075 = vld [vmem:[%s2074] sm:$0xff]
    %v2076 = vld [vmem:[%s2074 + $0x8] sm:$0xff]
    %v2077 = vrot.slane %v1593, 2
    %v2078 = vsel %vm1692, %v2077, 0
    %2080 = vmatprep.subr.mxu0 0.0
    %2081 = vmatpush1.msra.mxu0 %v2075
    %2082 = vmatprep.subr.mxu0 0.0
    %2083 = vmatpush1.msra.mxu0 %v2076
    %2084 = vmatprep.subr.mxu0 0.0
    %2085 = vmatpush1.msra.mxu0 0.0
    %2086 = vmatprep.subr.mxu0 0.0
    %2087 = vmatpush1.msra.mxu0 0.0
    %2088 = vmatprep.subr.mxu0 0.0
    %2089 = vmatpush1.msra.mxu0 0.0
    %2090 = vmatprep.subr.mxu0 0.0
    %2091 = vmatpush1.msra.mxu0 0.0
    %2092 = vmatprep.subr.mxu0 0.0
    %2093 = vmatpush1.msra.mxu0 0.0
    %2094 = vmatprep.subr.mxu0 0.0
    %2095 = vmatpush1.msra.mxu0 0.0
    %2096 = vmatprep.subr.mxu0 0.0
    %2097 = vmatpush1.msra.mxu0 0.0
    %2098 = vmatprep.subr.mxu0 0.0
    %2099 = vmatpush1.msra.mxu0 0.0
    %2100 = vmatprep.subr.mxu0 0.0
    %2101 = vmatpush1.msra.mxu0 0.0
    %2102 = vmatprep.subr.mxu0 0.0
    %2103 = vmatpush1.msra.mxu0 0.0
    %2104 = vmatprep.subr.mxu0 0.0
    %2105 = vmatpush1.msra.mxu0 0.0
    %2106 = vmatprep.subr.mxu0 0.0
    %2107 = vmatpush1.msra.mxu0 0.0
    %2108 = vmatprep.subr.mxu0 0.0
    %2109 = vmatpush1.msra.mxu0 0.0
    %2110 = vmatprep.subr.mxu0 0.0
    %2111 = vmatpush1.msra.mxu0 0.0
    %2112 = vmatprep.subr.mxu0 0.0
    %2113 = vmatpush1.msra.mxu0 0.0
    %2114 = vmatprep.subr.mxu0 0.0
    %2115 = vmatpush1.msra.mxu0 0.0
    %2116 = vmatprep.subr.mxu0 0.0
    %2117 = vmatpush1.msra.mxu0 0.0
    %2118 = vmatprep.subr.mxu0 0.0
    %2119 = vmatpush1.msra.mxu0 0.0
    %2120 = vmatprep.subr.mxu0 0.0
    %2121 = vmatpush1.msra.mxu0 0.0
    %2122 = vmatprep.subr.mxu0 0.0
    %2123 = vmatpush1.msra.mxu0 0.0
    %2124 = vmatprep.subr.mxu0 0.0
    %2125 = vmatpush1.msra.mxu0 0.0
    %2126 = vmatprep.subr.mxu0 0.0
    %2127 = vmatpush1.msra.mxu0 0.0
    %2128 = vmatprep.subr.mxu0 0.0
    %2129 = vmatpush1.msra.mxu0 0.0
    %2130 = vmatprep.subr.mxu0 0.0
    %2131 = vmatpush1.msra.mxu0 0.0
    %2132 = vmatprep.subr.mxu0 0.0
    %2133 = vmatpush1.msra.mxu0 0.0
    %2134 = vmatprep.subr.mxu0 0.0
    %2135 = vmatpush1.msra.mxu0 0.0
    %2136 = vmatprep.subr.mxu0 0.0
    %2137 = vmatpush1.msra.mxu0 0.0
    %2138 = vmatprep.subr.mxu0 0.0
    %2139 = vmatpush1.msra.mxu0 0.0
    %2140 = vmatprep.subr.mxu0 0.0
    %2141 = vmatpush1.msra.mxu0 0.0
    %2142 = vmatprep.subr.mxu0 0.0
    %2143 = vmatpush1.msra.mxu0 0.0
    %2144 = vmatprep.mubr.f32.mxu0 0.0
    %2145 = vmatmul.mubr.f32.gmra.mrb[0].mxu0 %v2078
    %v2146 = vpop.f32.mrb[0].mxu0
    %v2147 = vadd.f32 0.0, %v2146
    %v2148 = vpop.f32.mrb[0].mxu0
    %2149 = vdwg.mxu0
    %v2150 = vrot.slane %v1592, 4
    %v2151 = vsel %vm1692, %v2150, 0
    %2153 = vmatprep.subr.mxu0 0.0
    %2154 = vmatpush1.msra.mxu0 %v1846
    %2155 = vmatprep.subr.mxu0 0.0
    %2156 = vmatpush1.msra.mxu0 %v1847
    %2157 = vmatprep.subr.mxu0 0.0
    %2158 = vmatpush1.msra.mxu0 0.0
    %2159 = vmatprep.subr.mxu0 0.0
    %2160 = vmatpush1.msra.mxu0 0.0
    %2161 = vmatprep.subr.mxu0 0.0
    %2162 = vmatpush1.msra.mxu0 0.0
    %2163 = vmatprep.subr.mxu0 0.0
    %2164 = vmatpush1.msra.mxu0 0.0
    %2165 = vmatprep.subr.mxu0 0.0
    %2166 = vmatpush1.msra.mxu0 0.0
    %2167 = vmatprep.subr.mxu0 0.0
    %2168 = vmatpush1.msra.mxu0 0.0
    %2169 = vmatprep.subr.mxu0 0.0
    %2170 = vmatpush1.msra.mxu0 0.0
    %2171 = vmatprep.subr.mxu0 0.0
    %2172 = vmatpush1.msra.mxu0 0.0
    %2173 = vmatprep.subr.mxu0 0.0
    %2174 = vmatpush1.msra.mxu0 0.0
    %2175 = vmatprep.subr.mxu0 0.0
    %2176 = vmatpush1.msra.mxu0 0.0
    %2177 = vmatprep.subr.mxu0 0.0
    %2178 = vmatpush1.msra.mxu0 0.0
    %2179 = vmatprep.subr.mxu0 0.0
    %2180 = vmatpush1.msra.mxu0 0.0
    %2181 = vmatprep.subr.mxu0 0.0
    %2182 = vmatpush1.msra.mxu0 0.0
    %2183 = vmatprep.subr.mxu0 0.0
    %2184 = vmatpush1.msra.mxu0 0.0
    %2185 = vmatprep.subr.mxu0 0.0
    %2186 = vmatpush1.msra.mxu0 0.0
    %2187 = vmatprep.subr.mxu0 0.0
    %2188 = vmatpush1.msra.mxu0 0.0
    %2189 = vmatprep.subr.mxu0 0.0
    %2190 = vmatpush1.msra.mxu0 0.0
    %2191 = vmatprep.subr.mxu0 0.0
    %2192 = vmatpush1.msra.mxu0 0.0
    %2193 = vmatprep.subr.mxu0 0.0
    %2194 = vmatpush1.msra.mxu0 0.0
    %2195 = vmatprep.subr.mxu0 0.0
    %2196 = vmatpush1.msra.mxu0 0.0
    %2197 = vmatprep.subr.mxu0 0.0
    %2198 = vmatpush1.msra.mxu0 0.0
    %2199 = vmatprep.subr.mxu0 0.0
    %2200 = vmatpush1.msra.mxu0 0.0
    %2201 = vmatprep.subr.mxu0 0.0
    %2202 = vmatpush1.msra.mxu0 0.0
    %2203 = vmatprep.subr.mxu0 0.0
    %2204 = vmatpush1.msra.mxu0 0.0
    %2205 = vmatprep.subr.mxu0 0.0
    %2206 = vmatpush1.msra.mxu0 0.0
    %2207 = vmatprep.subr.mxu0 0.0
    %2208 = vmatpush1.msra.mxu0 0.0
    %2209 = vmatprep.subr.mxu0 0.0
    %2210 = vmatpush1.msra.mxu0 0.0
    %2211 = vmatprep.subr.mxu0 0.0
    %2212 = vmatpush1.msra.mxu0 0.0
    %2213 = vmatprep.subr.mxu0 0.0
    %2214 = vmatpush1.msra.mxu0 0.0
    %2215 = vmatprep.subr.mxu0 0.0
    %2216 = vmatpush1.msra.mxu0 0.0
    %2217 = vmatprep.mubr.f32.mxu0 0.0
    %2218 = vmatmul.mubr.f32.gmra.mrb[0].mxu0 %v2151
    %v2219 = vpop.f32.mrb[0].mxu0
    %v2220 = vadd.f32 %v2147, %v2219
    %v2221 = vpop.f32.mrb[0].mxu0
    %2222 = vdwg.mxu0
    %s2223 = scalar_lea.vmem %s10, 96
    %v2224 = vld [vmem:[%s2223] sm:$0xff]
    %v2225 = vld [vmem:[%s2223 + $0x8] sm:$0xff]
    %v2226 = vrot.slane %v1593, 4
    %v2227 = vsel %vm1692, %v2226, 0
    %2229 = vmatprep.subr.mxu0 0.0
    %2230 = vmatpush1.msra.mxu0 %v2224
    %2231 = vmatprep.subr.mxu0 0.0
    %2232 = vmatpush1.msra.mxu0 %v2225
    %2233 = vmatprep.subr.mxu0 0.0
    %2234 = vmatpush1.msra.mxu0 0.0
    %2235 = vmatprep.subr.mxu0 0.0
    %2236 = vmatpush1.msra.mxu0 0.0
    %2237 = vmatprep.subr.mxu0 0.0
    %2238 = vmatpush1.msra.mxu0 0.0
    %2239 = vmatprep.subr.mxu0 0.0
    %2240 = vmatpush1.msra.mxu0 0.0
    %2241 = vmatprep.subr.mxu0 0.0
    %2242 = vmatpush1.msra.mxu0 0.0
    %2243 = vmatprep.subr.mxu0 0.0
    %2244 = vmatpush1.msra.mxu0 0.0
    %2245 = vmatprep.subr.mxu0 0.0
    %2246 = vmatpush1.msra.mxu0 0.0
    %2247 = vmatprep.subr.mxu0 0.0
    %2248 = vmatpush1.msra.mxu0 0.0
    %2249 = vmatprep.subr.mxu0 0.0
    %2250 = vmatpush1.msra.mxu0 0.0
    %2251 = vmatprep.subr.mxu0 0.0
    %2252 = vmatpush1.msra.mxu0 0.0
    %2253 = vmatprep.subr.mxu0 0.0
    %2254 = vmatpush1.msra.mxu0 0.0
    %2255 = vmatprep.subr.mxu0 0.0
    %2256 = vmatpush1.msra.mxu0 0.0
    %2257 = vmatprep.subr.mxu0 0.0
    %2258 = vmatpush1.msra.mxu0 0.0
    %2259 = vmatprep.subr.mxu0 0.0
    %2260 = vmatpush1.msra.mxu0 0.0
    %2261 = vmatprep.subr.mxu0 0.0
    %2262 = vmatpush1.msra.mxu0 0.0
    %2263 = vmatprep.subr.mxu0 0.0
    %2264 = vmatpush1.msra.mxu0 0.0
    %2265 = vmatprep.subr.mxu0 0.0
    %2266 = vmatpush1.msra.mxu0 0.0
    %2267 = vmatprep.subr.mxu0 0.0
    %2268 = vmatpush1.msra.mxu0 0.0
    %2269 = vmatprep.subr.mxu0 0.0
    %2270 = vmatpush1.msra.mxu0 0.0
    %2271 = vmatprep.subr.mxu0 0.0
    %2272 = vmatpush1.msra.mxu0 0.0
    %2273 = vmatprep.subr.mxu0 0.0
    %2274 = vmatpush1.msra.mxu0 0.0
    %2275 = vmatprep.subr.mxu0 0.0
    %2276 = vmatpush1.msra.mxu0 0.0
    %2277 = vmatprep.subr.mxu0 0.0
    %2278 = vmatpush1.msra.mxu0 0.0
    %2279 = vmatprep.subr.mxu0 0.0
    %2280 = vmatpush1.msra.mxu0 0.0
    %2281 = vmatprep.subr.mxu0 0.0
    %2282 = vmatpush1.msra.mxu0 0.0
    %2283 = vmatprep.subr.mxu0 0.0
    %2284 = vmatpush1.msra.mxu0 0.0
    %2285 = vmatprep.subr.mxu0 0.0
    %2286 = vmatpush1.msra.mxu0 0.0
    %2287 = vmatprep.subr.mxu0 0.0
    %2288 = vmatpush1.msra.mxu0 0.0
    %2289 = vmatprep.subr.mxu0 0.0
    %2290 = vmatpush1.msra.mxu0 0.0
    %2291 = vmatprep.subr.mxu0 0.0
    %2292 = vmatpush1.msra.mxu0 0.0
    %2293 = vmatprep.mubr.f32.mxu0 0.0
    %2294 = vmatmul.mubr.f32.gmra.mrb[0].mxu0 %v2227
    %v2295 = vpop.f32.mrb[0].mxu0
    %v2296 = vadd.f32 0.0, %v2295
    %v2297 = vpop.f32.mrb[0].mxu0
    %2298 = vdwg.mxu0
    %v2299 = vadd.f32 %v1924, %v2296
    %s2300 = scalar_lea.vmem %s10, 112
    %v2301 = vld [vmem:[%s2300] sm:$0xff]
    %v2302 = vld [vmem:[%s2300 + $0x8] sm:$0xff]
    %v2303 = vrot.slane %v1593, 6
    %v2304 = vsel %vm1692, %v2303, 0
    %2306 = vmatprep.subr.mxu0 0.0
    %2307 = vmatpush1.msra.mxu0 %v2301
    %2308 = vmatprep.subr.mxu0 0.0
    %2309 = vmatpush1.msra.mxu0 %v2302
    %2310 = vmatprep.subr.mxu0 0.0
    %2311 = vmatpush1.msra.mxu0 0.0
    %2312 = vmatprep.subr.mxu0 0.0
    %2313 = vmatpush1.msra.mxu0 0.0
    %2314 = vmatprep.subr.mxu0 0.0
    %2315 = vmatpush1.msra.mxu0 0.0
    %2316 = vmatprep.subr.mxu0 0.0
    %2317 = vmatpush1.msra.mxu0 0.0
    %2318 = vmatprep.subr.mxu0 0.0
    %2319 = vmatpush1.msra.mxu0 0.0
    %2320 = vmatprep.subr.mxu0 0.0
    %2321 = vmatpush1.msra.mxu0 0.0
    %2322 = vmatprep.subr.mxu0 0.0
    %2323 = vmatpush1.msra.mxu0 0.0
    %2324 = vmatprep.subr.mxu0 0.0
    %2325 = vmatpush1.msra.mxu0 0.0
    %2326 = vmatprep.subr.mxu0 0.0
    %2327 = vmatpush1.msra.mxu0 0.0
    %2328 = vmatprep.subr.mxu0 0.0
    %2329 = vmatpush1.msra.mxu0 0.0
    %2330 = vmatprep.subr.mxu0 0.0
    %2331 = vmatpush1.msra.mxu0 0.0
    %2332 = vmatprep.subr.mxu0 0.0
    %2333 = vmatpush1.msra.mxu0 0.0
    %2334 = vmatprep.subr.mxu0 0.0
    %2335 = vmatpush1.msra.mxu0 0.0
    %2336 = vmatprep.subr.mxu0 0.0
    %2337 = vmatpush1.msra.mxu0 0.0
    %2338 = vmatprep.subr.mxu0 0.0
    %2339 = vmatpush1.msra.mxu0 0.0
    %2340 = vmatprep.subr.mxu0 0.0
    %2341 = vmatpush1.msra.mxu0 0.0
    %2342 = vmatprep.subr.mxu0 0.0
    %2343 = vmatpush1.msra.mxu0 0.0
    %2344 = vmatprep.subr.mxu0 0.0
    %2345 = vmatpush1.msra.mxu0 0.0
    %2346 = vmatprep.subr.mxu0 0.0
    %2347 = vmatpush1.msra.mxu0 0.0
    %2348 = vmatprep.subr.mxu0 0.0
    %2349 = vmatpush1.msra.mxu0 0.0
    %2350 = vmatprep.subr.mxu0 0.0
    %2351 = vmatpush1.msra.mxu0 0.0
    %2352 = vmatprep.subr.mxu0 0.0
    %2353 = vmatpush1.msra.mxu0 0.0
    %2354 = vmatprep.subr.mxu0 0.0
    %2355 = vmatpush1.msra.mxu0 0.0
    %2356 = vmatprep.subr.mxu0 0.0
    %2357 = vmatpush1.msra.mxu0 0.0
    %2358 = vmatprep.subr.mxu0 0.0
    %2359 = vmatpush1.msra.mxu0 0.0
    %2360 = vmatprep.subr.mxu0 0.0
    %2361 = vmatpush1.msra.mxu0 0.0
    %2362 = vmatprep.subr.mxu0 0.0
    %2363 = vmatpush1.msra.mxu0 0.0
    %2364 = vmatprep.subr.mxu0 0.0
    %2365 = vmatpush1.msra.mxu0 0.0
    %2366 = vmatprep.subr.mxu0 0.0
    %2367 = vmatpush1.msra.mxu0 0.0
    %2368 = vmatprep.subr.mxu0 0.0
    %2369 = vmatpush1.msra.mxu0 0.0
    %2370 = vmatprep.mubr.f32.mxu0 0.0
    %2371 = vmatmul.mubr.f32.gmra.mrb[0].mxu0 %v2304
    %v2372 = vpop.f32.mrb[0].mxu0
    %v2373 = vadd.f32 0.0, %v2372
    %v2374 = vpop.f32.mrb[0].mxu0
    %2375 = vdwg.mxu0
    %v2376 = vadd.f32 %v2071, %v2373
    %s2377 = scalar_lea.vmem %s10, 128
    %v2378 = vld [vmem:[%s2377] sm:$0xff]
    %v2379 = vld [vmem:[%s2377 + $0x8] sm:$0xff]
    %v2381 = vsel %vm1692, %v1594, 0
    %2383 = vmatprep.subr.mxu0 0.0
    %2384 = vmatpush1.msra.mxu0 %v2378
    %2385 = vmatprep.subr.mxu0 0.0
    %2386 = vmatpush1.msra.mxu0 %v2379
    %2387 = vmatprep.subr.mxu0 0.0
    %2388 = vmatpush1.msra.mxu0 0.0
    %2389 = vmatprep.subr.mxu0 0.0
    %2390 = vmatpush1.msra.mxu0 0.0
    %2391 = vmatprep.subr.mxu0 0.0
    %2392 = vmatpush1.msra.mxu0 0.0
    %2393 = vmatprep.subr.mxu0 0.0
    %2394 = vmatpush1.msra.mxu0 0.0
    %2395 = vmatprep.subr.mxu0 0.0
    %2396 = vmatpush1.msra.mxu0 0.0
    %2397 = vmatprep.subr.mxu0 0.0
    %2398 = vmatpush1.msra.mxu0 0.0
    %2399 = vmatprep.subr.mxu0 0.0
    %2400 = vmatpush1.msra.mxu0 0.0
    %2401 = vmatprep.subr.mxu0 0.0
    %2402 = vmatpush1.msra.mxu0 0.0
    %2403 = vmatprep.subr.mxu0 0.0
    %2404 = vmatpush1.msra.mxu0 0.0
    %2405 = vmatprep.subr.mxu0 0.0
    %2406 = vmatpush1.msra.mxu0 0.0
    %2407 = vmatprep.subr.mxu0 0.0
    %2408 = vmatpush1.msra.mxu0 0.0
    %2409 = vmatprep.subr.mxu0 0.0
    %2410 = vmatpush1.msra.mxu0 0.0
    %2411 = vmatprep.subr.mxu0 0.0
    %2412 = vmatpush1.msra.mxu0 0.0
    %2413 = vmatprep.subr.mxu0 0.0
    %2414 = vmatpush1.msra.mxu0 0.0
    %2415 = vmatprep.subr.mxu0 0.0
    %2416 = vmatpush1.msra.mxu0 0.0
    %2417 = vmatprep.subr.mxu0 0.0
    %2418 = vmatpush1.msra.mxu0 0.0
    %2419 = vmatprep.subr.mxu0 0.0
    %2420 = vmatpush1.msra.mxu0 0.0
    %2421 = vmatprep.subr.mxu0 0.0
    %2422 = vmatpush1.msra.mxu0 0.0
    %2423 = vmatprep.subr.mxu0 0.0
    %2424 = vmatpush1.msra.mxu0 0.0
    %2425 = vmatprep.subr.mxu0 0.0
    %2426 = vmatpush1.msra.mxu0 0.0
    %2427 = vmatprep.subr.mxu0 0.0
    %2428 = vmatpush1.msra.mxu0 0.0
    %2429 = vmatprep.subr.mxu0 0.0
    %2430 = vmatpush1.msra.mxu0 0.0
    %2431 = vmatprep.subr.mxu0 0.0
    %2432 = vmatpush1.msra.mxu0 0.0
    %2433 = vmatprep.subr.mxu0 0.0
    %2434 = vmatpush1.msra.mxu0 0.0
    %2435 = vmatprep.subr.mxu0 0.0
    %2436 = vmatpush1.msra.mxu0 0.0
    %2437 = vmatprep.subr.mxu0 0.0
    %2438 = vmatpush1.msra.mxu0 0.0
    %2439 = vmatprep.subr.mxu0 0.0
    %2440 = vmatpush1.msra.mxu0 0.0
    %2441 = vmatprep.subr.mxu0 0.0
    %2442 = vmatpush1.msra.mxu0 0.0
    %2443 = vmatprep.subr.mxu0 0.0
    %2444 = vmatpush1.msra.mxu0 0.0
    %2445 = vmatprep.subr.mxu0 0.0
    %2446 = vmatpush1.msra.mxu0 0.0
    %2447 = vmatprep.mubr.f32.mxu0 0.0
    %2448 = vmatmul.mubr.f32.gmra.mrb[0].mxu0 %v2381
    %v2449 = vpop.f32.mrb[0].mxu0
    %v2450 = vadd.f32 0.0, %v2449
    %v2451 = vpop.f32.mrb[0].mxu0
    %2452 = vdwg.mxu0
    %v2453 = vadd.f32 %v2220, %v2450
    %v2454 = vadd.f32 %v2299, %v2376
    %v2455 = vadd.f32 %v2454, %v2453
    %v2456 = vmax.f32 %v2455, 0.0
    %v2457 = vld [vmem:[%s12] sm:$0xff]
    %v2458 = vld [vmem:[%s12 + $0x8] sm:$0xff]
    %v2459 = vld [vmem:[%s12 + $0x10] sm:$0xff]
    %v2460 = vld [vmem:[%s12 + $0x18] sm:$0xff]
    %v2461 = vld [vmem:[%s12 + $0x20] sm:$0xff]
    %v2462 = vld [vmem:[%s12 + $0x28] sm:$0xff]
    %v2463 = vld [vmem:[%s12 + $0x30] sm:$0xff]
    %v2464 = vld [vmem:[%s12 + $0x38] sm:$0xff]
    %v2465 = vld [vmem:[%s12 + $0x40] sm:$0xff]
    %v2466 = vld [vmem:[%s12 + $0x48] sm:$0xff]
    %v2467 = vld [vmem:[%s12 + $0x50] sm:$0xff]
    %v2468 = vld [vmem:[%s12 + $0x58] sm:$0xff]
    %v2469 = vld [vmem:[%s12 + $0x60] sm:$0xff]
    %v2470 = vld [vmem:[%s12 + $0x68] sm:$0xff]
    %v2471 = vld [vmem:[%s12 + $0x70] sm:$0xff]
    %v2472 = vld [vmem:[%s12 + $0x78] sm:$0xff]
    %v2473 = vld [vmem:[%s13] sm:$0x1]
    %v2475 = vlaneseq
    %v2476 = vshrl.u32 %v2475, 7
    %v2477 = vsub.s32 0, %v2476
    %v2478 = vrot.slane %v2473, %v2477
    %2480 = vmatprep.subr.mxu0 0.0
    %2481 = vmatpush1.msra.mxu0 %v2457
    %2482 = vmatprep.subr.mxu0 0.0
    %2483 = vmatpush1.msra.mxu0 %v2458
    %2484 = vmatprep.subr.mxu0 0.0
    %2485 = vmatpush1.msra.mxu0 %v2459
    %2486 = vmatprep.subr.mxu0 0.0
    %2487 = vmatpush1.msra.mxu0 %v2460
    %2488 = vmatprep.subr.mxu0 0.0
    %2489 = vmatpush1.msra.mxu0 %v2461
    %2490 = vmatprep.subr.mxu0 0.0
    %2491 = vmatpush1.msra.mxu0 %v2462
    %2492 = vmatprep.subr.mxu0 0.0
    %2493 = vmatpush1.msra.mxu0 %v2463
    %2494 = vmatprep.subr.mxu0 0.0
    %2495 = vmatpush1.msra.mxu0 %v2464
    %2496 = vmatprep.subr.mxu0 0.0
    %2497 = vmatpush1.msra.mxu0 %v2465
    %2498 = vmatprep.subr.mxu0 0.0
    %2499 = vmatpush1.msra.mxu0 %v2466
    %2500 = vmatprep.subr.mxu0 0.0
    %2501 = vmatpush1.msra.mxu0 %v2467
    %2502 = vmatprep.subr.mxu0 0.0
    %2503 = vmatpush1.msra.mxu0 %v2468
    %2504 = vmatprep.subr.mxu0 0.0
    %2505 = vmatpush1.msra.mxu0 %v2469
    %2506 = vmatprep.subr.mxu0 0.0
    %2507 = vmatpush1.msra.mxu0 %v2470
    %2508 = vmatprep.subr.mxu0 0.0
    %2509 = vmatpush1.msra.mxu0 %v2471
    %2510 = vmatprep.subr.mxu0 0.0
    %2511 = vmatpush1.msra.mxu0 %v2472
    %2512 = vmatprep.subr.mxu0 0.0
    %2513 = vmatpush1.msra.mxu0 0.0
    %2514 = vmatprep.subr.mxu0 0.0
    %2515 = vmatpush1.msra.mxu0 0.0
    %2516 = vmatprep.subr.mxu0 0.0
    %2517 = vmatpush1.msra.mxu0 0.0
    %2518 = vmatprep.subr.mxu0 0.0
    %2519 = vmatpush1.msra.mxu0 0.0
    %2520 = vmatprep.subr.mxu0 0.0
    %2521 = vmatpush1.msra.mxu0 0.0
    %2522 = vmatprep.subr.mxu0 0.0
    %2523 = vmatpush1.msra.mxu0 0.0
    %2524 = vmatprep.subr.mxu0 0.0
    %2525 = vmatpush1.msra.mxu0 0.0
    %2526 = vmatprep.subr.mxu0 0.0
    %2527 = vmatpush1.msra.mxu0 0.0
    %2528 = vmatprep.subr.mxu0 0.0
    %2529 = vmatpush1.msra.mxu0 0.0
    %2530 = vmatprep.subr.mxu0 0.0
    %2531 = vmatpush1.msra.mxu0 0.0
    %2532 = vmatprep.subr.mxu0 0.0
    %2533 = vmatpush1.msra.mxu0 0.0
    %2534 = vmatprep.subr.mxu0 0.0
    %2535 = vmatpush1.msra.mxu0 0.0
    %2536 = vmatprep.subr.mxu0 0.0
    %2537 = vmatpush1.msra.mxu0 0.0
    %2538 = vmatprep.subr.mxu0 0.0
    %2539 = vmatpush1.msra.mxu0 0.0
    %2540 = vmatprep.subr.mxu0 0.0
    %2541 = vmatpush1.msra.mxu0 0.0
    %2542 = vmatprep.subr.mxu0 0.0
    %2543 = vmatpush1.msra.mxu0 0.0
    %2544 = vmatprep.mubr.f32.mxu0 0.0
    %2545 = vmatmul.mubr.f32.gmra.mrb[0].mxu0 %v2456
    %v2546 = vpop.f32.mrb[0].mxu0
    %v2547 = vadd.f32 %v2478, %v2546
    %v2548 = vpop.f32.mrb[0].mxu0
    %2549 = vdwg.mxu0
    %2550 = vst [vmem:[#allocation2] sm:$0x3] %v2547
    // Predicated region
    $region58: #{branch_dddqn_forward.1} parent=1 // pred_check
      _
    $region59: #{branch_dddqn_forward.1} parent=1 // pred_check_branch
      %2552 = sbr.rel (0) target = $region61
    $region60: #{branch_dddqn_forward.1} parent=1 // pred_region
      %s2554 = ssub.s32 32, 32
      %2555 = vsyncadd [#allocation3], %s2554
      %s2557 = sshll.u32 [#allocation2], 4
      %s2558 = int_to_ptr.vmem [resolvable:$true] %s2557
      %2560 = dma.vmem_to_hbm [thread:$0]  %s2558, 32, %s14, [#allocation3]
    $region61: #{branch_dddqn_forward.1} parent=1 // pred_fallthru
      _
    // Predicated region
    $region62: #{branch_dddqn_forward.1} parent=1 // pred_check
      _
    $region63: #{branch_dddqn_forward.1} parent=1 // pred_check_branch
      %2562 = sbr.rel (0) target = $region65
    $region64: #{branch_dddqn_forward.1} parent=1 // pred_region
      %2563 = dma.done [#allocation3], 32
    $region65: #{branch_dddqn_forward.1} parent=1 // pred_fallthru
      _
    %2564 = vsyncpa [#allocation3], 1

</llo_original>
